<compile_context>
chip_gen: v7x
topology: tpu7x:2x2x1
jax: 0.10.0
libtpu: 0.0.40
codegen_flags: <defaults>
</compile_context>

<pallas_src>
import math

import jax
import jax.numpy as jnp
from jax.experimental import pallas as pl
from jax.experimental.pallas import tpu as pltpu

HIDDEN = 400
IN_DIM = 5
OUT_DIM = 4
TILE_B = 128  # batch rows per grid step (M dim fed to the MXU)


def mlp_kernel(x_ref, w1_ref, b1_ref, w2_ref, b2_ref, w3_ref, b3_ref, o_ref):
    # One (TILE_B, IN_DIM) slab of the batch per grid step. Weights have a
    # constant index_map, so they sit in VMEM for the whole grid while the
    # x/o tiles stream through (auto double-buffered by BlockSpec).
    x = x_ref[...]  # bf16 (TILE_B, IN_DIM)

    h1 = jnp.dot(x, w1_ref[...], preferred_element_type=jnp.float32) + b1_ref[...]
    h1 = jnp.tanh(h1).astype(jnp.bfloat16)   # tanh in f32 (v5e-safe), bf16 for next MXU pass

    h2 = jnp.dot(h1, w2_ref[...], preferred_element_type=jnp.float32) + b2_ref[...]
    h2 = jnp.tanh(h2).astype(jnp.bfloat16)

    o_ref[...] = (
        jnp.dot(h2, w3_ref[...], preferred_element_type=jnp.float32) + b3_ref[...]
    )


def simulation_forward(x, params):
    """x: (B, IN_DIM) float32/bf16. Returns (B, OUT_DIM) float32."""
    w1, b1, w2, b2, w3, b3 = params
    B = x.shape[0]
    Bp = pl.cdiv(B, TILE_B) * TILE_B  # pad batch to a full tile multiple

    x_bf16 = x.astype(jnp.bfloat16)
    if Bp != B:
        x_bf16 = jnp.pad(x_bf16, ((0, Bp - B), (0, 0)))

    def const_spec(shape):
        return pl.BlockSpec(shape, lambda i: tuple(0 for _ in shape))

    out = pl.pallas_call(
        mlp_kernel,
        out_shape=jax.ShapeDtypeStruct((Bp, OUT_DIM), jnp.float32),
        grid=(Bp // TILE_B,),
        in_specs=[
            pl.BlockSpec((TILE_B, IN_DIM), lambda i: (i, 0)),
            const_spec(w1.shape), const_spec(b1.shape),
            const_spec(w2.shape), const_spec(b2.shape),
            const_spec(w3.shape), const_spec(b3.shape),
        ],
        out_specs=pl.BlockSpec((TILE_B, OUT_DIM), lambda i: (i, 0)),
        compiler_params=pltpu.CompilerParams(
            dimension_semantics=("parallel",),       # shard batch tiles across TCs (v7x)
            vmem_limit_bytes=8 * 1024 * 1024,        # working set is ~2 MiB
        ),
    )(x_bf16, w1, b1, w2, b2, w3, b3)
    return out[:B]


def init_linear(key, in_features, out_features):
    # Deterministic init mirroring torch.nn.Linear's default:
    # U(-1/sqrt(in), 1/sqrt(in)) for weight and bias. Weights are stored bf16
    # (MXU-native / halves weight DMA); biases stay f32.
    kw, kb = jax.random.split(key)
    bound = 1.0 / math.sqrt(in_features)
    w = jax.random.uniform(
        kw, (in_features, out_features), jnp.float32, minval=-bound, maxval=bound
    ).astype(jnp.bfloat16)
    b = jax.random.uniform(
        kb, (1, out_features), jnp.float32, minval=-bound, maxval=bound
    )
    return w, b


def reference_forward_matched(x, params):
    # Same numerics as the kernel (bf16 weights/activations, f32 accumulation).
    w1, b1, w2, b2, w3, b3 = params
    xb = x.astype(jnp.bfloat16)
    h1 = jnp.tanh(jnp.dot(xb, w1, preferred_element_type=jnp.float32) + b1)
    h1 = h1.astype(jnp.bfloat16)
    h2 = jnp.tanh(jnp.dot(h1, w2, preferred_element_type=jnp.float32) + b2)
    h2 = h2.astype(jnp.bfloat16)
    return jnp.dot(h2, w3, preferred_element_type=jnp.float32) + b3


def reference_forward_f32(x, params):
    # Full-f32 reference (matches the PyTorch module's math up to bf16 weight
    # quantization, which is a deliberate perf trade).
    w1, b1, w2, b2, w3, b3 = params
    w1, w2, w3 = (w.astype(jnp.float32) for w in (w1, w2, w3))
    h1 = jnp.tanh(x @ w1 + b1)
    h2 = jnp.tanh(h1 @ w2 + b2)
    return h2 @ w3 + b3


if __name__ == "__main__":
    key = jax.random.PRNGKey(0)
    kx, kx2, k1, k2, k3 = jax.random.split(key, 5)

    w1, b1 = init_linear(k1, IN_DIM, HIDDEN)
    w2, b2 = init_linear(k2, HIDDEN, HIDDEN)
    w3, b3 = init_linear(k3, HIDDEN, OUT_DIM)
    params = (w1, b1, w2, b2, w3, b3)

    # Small-batch run (original use case: B=8 cart-pole states).
    B = 8
    x = jax.random.normal(kx, (B, IN_DIM), jnp.float32)
    out = jax.block_until_ready(simulation_forward(x, params))
    assert out.shape == (B, OUT_DIM)
    ref_matched = reference_forward_matched(x, params)
    ref_f32 = reference_forward_f32(x, params)
    assert jnp.allclose(out, ref_matched, atol=1e-3, rtol=1e-3)
    assert jnp.allclose(out, ref_f32, atol=1e-1, rtol=1e-1)  # bf16-weight trade-off

    # Multi-tile run to exercise the batch grid + padding path.
    B2 = 260
    x2 = jax.random.normal(kx2, (B2, IN_DIM), jnp.float32)
    out2 = jax.block_until_ready(simulation_forward(x2, params))
    assert out2.shape == (B2, OUT_DIM)
    assert jnp.allclose(out2, reference_forward_matched(x2, params), atol=1e-3, rtol=1e-3)

    print("KERNEL_OK")
</pallas_src>

<mosaic_0001>
module attributes {stable_mosaic.version = 11 : i64} {
  func.func @mlp_kernel(%arg0: i32, %arg1: memref<128x5xbf16, #tpu.memory_space<vmem>>, %arg2: memref<5x400xbf16, #tpu.memory_space<vmem>>, %arg3: memref<1x400xf32, #tpu.memory_space<vmem>>, %arg4: memref<400x400xbf16, #tpu.memory_space<vmem>>, %arg5: memref<1x400xf32, #tpu.memory_space<vmem>>, %arg6: memref<400x4xbf16, #tpu.memory_space<vmem>>, %arg7: memref<1x4xf32, #tpu.memory_space<vmem>>, %arg8: memref<128x4xf32, #tpu.memory_space<vmem>>) attributes {dimension_semantics = [#tpu.dimension_semantics<parallel>], iteration_bounds = array<i64: 1>, scalar_prefetch = 0 : i64, scratch_operands = 0 : i64, tpu.core_type = #tpu.core_type<tc>, window_params = [{transform_indices = @transform_0, window_bounds = array<i64: 128, 5>}, {pipeline_mode = #tpu.pipeline_mode<synchronous>, transform_indices = @transform_1, window_bounds = array<i64: 5, 400>}, {pipeline_mode = #tpu.pipeline_mode<synchronous>, transform_indices = @transform_2, window_bounds = array<i64: 1, 400>}, {pipeline_mode = #tpu.pipeline_mode<synchronous>, transform_indices = @transform_3, window_bounds = array<i64: 400, 400>}, {pipeline_mode = #tpu.pipeline_mode<synchronous>, transform_indices = @transform_4, window_bounds = array<i64: 1, 400>}, {pipeline_mode = #tpu.pipeline_mode<synchronous>, transform_indices = @transform_5, window_bounds = array<i64: 400, 4>}, {pipeline_mode = #tpu.pipeline_mode<synchronous>, transform_indices = @transform_6, window_bounds = array<i64: 1, 4>}, {transform_indices = @transform_7, window_bounds = array<i64: 128, 4>}]} {
    %c0 = arith.constant 0 : index
    %c0_0 = arith.constant 0 : index
    %0 = vector.load %arg1[%c0, %c0_0] : memref<128x5xbf16, #tpu.memory_space<vmem>>, vector<128x5xbf16>
    %c0_1 = arith.constant 0 : index
    %c0_2 = arith.constant 0 : index
    %1 = vector.load %arg2[%c0_1, %c0_2] : memref<5x400xbf16, #tpu.memory_space<vmem>>, vector<5x400xbf16>
    %cst = arith.constant dense<0.000000e+00> : vector<128x400xf32>
    %2 = tpu.matmul %0, %1, %cst {dimension_numbers = #tpu.dot_dimension_numbers<[1], [0], [0], [1], [0, 0, 1, 1], [], []>} : vector<128x5xbf16>, vector<5x400xbf16>, vector<128x400xf32> -> vector<128x400xf32>
    %c0_3 = arith.constant 0 : index
    %c0_4 = arith.constant 0 : index
    %3 = vector.load %arg3[%c0_3, %c0_4] : memref<1x400xf32, #tpu.memory_space<vmem>>, vector<1x400xf32>
    %4 = vector.broadcast %3 : vector<1x400xf32> to vector<128x400xf32>
    %5 = arith.addf %2, %4 : vector<128x400xf32>
    %6 = math.tanh %5 : vector<128x400xf32>
    %7 = arith.truncf %6 : vector<128x400xf32> to vector<128x400xbf16>
    %c0_5 = arith.constant 0 : index
    %c0_6 = arith.constant 0 : index
    %8 = vector.load %arg4[%c0_5, %c0_6] : memref<400x400xbf16, #tpu.memory_space<vmem>>, vector<400x400xbf16>
    %cst_7 = arith.constant dense<0.000000e+00> : vector<128x400xf32>
    %9 = tpu.matmul %7, %8, %cst_7 {dimension_numbers = #tpu.dot_dimension_numbers<[1], [0], [0], [1], [0, 0, 1, 1], [], []>} : vector<128x400xbf16>, vector<400x400xbf16>, vector<128x400xf32> -> vector<128x400xf32>
    %c0_8 = arith.constant 0 : index
    %c0_9 = arith.constant 0 : index
    %10 = vector.load %arg5[%c0_8, %c0_9] : memref<1x400xf32, #tpu.memory_space<vmem>>, vector<1x400xf32>
    %11 = vector.broadcast %10 : vector<1x400xf32> to vector<128x400xf32>
    %12 = arith.addf %9, %11 : vector<128x400xf32>
    %13 = math.tanh %12 : vector<128x400xf32>
    %14 = arith.truncf %13 : vector<128x400xf32> to vector<128x400xbf16>
    %c0_10 = arith.constant 0 : index
    %c0_11 = arith.constant 0 : index
    %15 = vector.load %arg6[%c0_10, %c0_11] : memref<400x4xbf16, #tpu.memory_space<vmem>>, vector<400x4xbf16>
    %cst_12 = arith.constant dense<0.000000e+00> : vector<128x4xf32>
    %16 = tpu.matmul %14, %15, %cst_12 {dimension_numbers = #tpu.dot_dimension_numbers<[1], [0], [0], [1], [0, 0, 1, 1], [], []>} : vector<128x400xbf16>, vector<400x4xbf16>, vector<128x4xf32> -> vector<128x4xf32>
    %c0_13 = arith.constant 0 : index
    %c0_14 = arith.constant 0 : index
    %17 = vector.load %arg7[%c0_13, %c0_14] : memref<1x4xf32, #tpu.memory_space<vmem>>, vector<1x4xf32>
    %18 = vector.broadcast %17 : vector<1x4xf32> to vector<128x4xf32>
    %19 = arith.addf %16, %18 : vector<128x4xf32>
    %c0_15 = arith.constant 0 : index
    %c0_16 = arith.constant 0 : index
    %20 = vector.load %arg8[%c0_15, %c0_16] : memref<128x4xf32, #tpu.memory_space<vmem>>, vector<128x4xf32>
    tpu.vector_store %arg8[%c0_15, %c0_16], %19 {strides = array<i32>} : memref<128x4xf32, #tpu.memory_space<vmem>>, vector<128x4xf32>,
    return
  }
  func.func @transform_0(%arg0: i32) -> (i32, i32) {
    %c0_i32 = arith.constant 0 : i32
    %c0_i32_0 = arith.constant 0 : i32
    return %arg0, %c0_i32 : i32, i32
  }
  func.func @transform_1(%arg0: i32) -> (i32, i32) {
    %c0_i32 = arith.constant 0 : i32
    %c0_i32_0 = arith.constant 0 : i32
    %c0_i32_1 = arith.constant 0 : i32
    return %c0_i32, %c0_i32_0 : i32, i32
  }
  func.func @transform_2(%arg0: i32) -> (i32, i32) {
    %c0_i32 = arith.constant 0 : i32
    %c0_i32_0 = arith.constant 0 : i32
    %c0_i32_1 = arith.constant 0 : i32
    return %c0_i32, %c0_i32_0 : i32, i32
  }
  func.func @transform_3(%arg0: i32) -> (i32, i32) {
    %c0_i32 = arith.constant 0 : i32
    %c0_i32_0 = arith.constant 0 : i32
    %c0_i32_1 = arith.constant 0 : i32
    return %c0_i32, %c0_i32_0 : i32, i32
  }
  func.func @transform_4(%arg0: i32) -> (i32, i32) {
    %c0_i32 = arith.constant 0 : i32
    %c0_i32_0 = arith.constant 0 : i32
    %c0_i32_1 = arith.constant 0 : i32
    return %c0_i32, %c0_i32_0 : i32, i32
  }
  func.func @transform_5(%arg0: i32) -> (i32, i32) {
    %c0_i32 = arith.constant 0 : i32
    %c0_i32_0 = arith.constant 0 : i32
    %c0_i32_1 = arith.constant 0 : i32
    return %c0_i32, %c0_i32_0 : i32, i32
  }
  func.func @transform_6(%arg0: i32) -> (i32, i32) {
    %c0_i32 = arith.constant 0 : i32
    %c0_i32_0 = arith.constant 0 : i32
    %c0_i32_1 = arith.constant 0 : i32
    return %c0_i32, %c0_i32_0 : i32, i32
  }
  func.func @transform_7(%arg0: i32) -> (i32, i32) {
    %c0_i32 = arith.constant 0 : i32
    %c0_i32_0 = arith.constant 0 : i32
    return %arg0, %c0_i32 : i32, i32
  }
}

</mosaic_0001>

<llo_original>
// kernel: tpu_custom_call.1
$region0: #{tpu_custom_call.1}
  #allocation0 [shape = 'u32[]', space=smem, size = 0x4, offset = 0x4, fixed_abs, tag = 'smem constant byte address 0x4 - core index']
  #allocation1 [shape = 'u32[144,128]{1,0:T(1,128)}', space=vmem, size = 0x12000, scoped, tag = 'internal scratch']
  %s0 = inlined_call_operand.vmem [shape: bf16[128,5], index: 0, kind: input, shape index: {}]
  %s1 = inlined_call_operand.vmem [shape: bf16[5,400], index: 1, kind: input, shape index: {}]
  %s2 = inlined_call_operand.vmem [shape: f32[1,400], index: 2, kind: input, shape index: {}]
  %s3 = inlined_call_operand.hbm [shape: bf16[400,400], index: 3, kind: input, shape index: {}]
  %s4 = inlined_call_operand.vmem [shape: f32[1,400], index: 4, kind: input, shape index: {}]
  %s5 = inlined_call_operand.vmem [shape: bf16[400,4], index: 5, kind: input, shape index: {}]
  %s6 = inlined_call_operand.vmem [shape: f32[1,4], index: 6, kind: input, shape index: {}]
  %s7 = inlined_call_operand.vmem [shape: f32[128,4], index: 7, kind: output, shape index: {}]
  %s8 = sld [smem:[#allocation0]]
  $region42: #{tpu_custom_call.1} parent=0
    _
  %s10 = ssub.s32 1, %s8
  %s11 = scalar_select 0, %s10, %s8
  $region1: #{tpu_custom_call.1} parent=0
    #allocation2 [shape = 'u8[409600]{0}', space=vmem, size = 0x64000, scoped, tag = 'input window, operand 3, single buffered']
    #allocation3 [shape = 's32[1]{0}', space=sflag, size = 0x4, scoped, tag = 'scoped memory for tpu_custom_call.1']
    %12 = vsyncpa [#allocation3], 0
    // Predicated region
    $region2: #{tpu_custom_call.1} parent=1 // pred_check
      _
    $region3: #{tpu_custom_call.1} parent=1 // pred_check_branch
      %14 = sbr.rel (0) target = $region5
    $region4: #{tpu_custom_call.1} parent=1 // pred_region
      _
    $region5: #{tpu_custom_call.1} parent=1 // pred_fallthru
      _
    // Predicated region
    $region6: #{tpu_custom_call.1} parent=1 // pred_check
      _
    $region7: #{tpu_custom_call.1} parent=1 // pred_check_branch
      %16 = sbr.rel (0) target = $region9
    $region8: #{tpu_custom_call.1} parent=1 // pred_region
      _
    $region9: #{tpu_custom_call.1} parent=1 // pred_fallthru
      _
    // Predicated region
    $region10: #{tpu_custom_call.1} parent=1 // pred_check
      _
    $region11: #{tpu_custom_call.1} parent=1 // pred_check_branch
      %18 = sbr.rel (0) target = $region13
    $region12: #{tpu_custom_call.1} parent=1 // pred_region
      _
    $region13: #{tpu_custom_call.1} parent=1 // pred_fallthru
      _
    // Predicated region
    $region14: #{tpu_custom_call.1} parent=1 // pred_check
      _
    $region15: #{tpu_custom_call.1} parent=1 // pred_check_branch
      %20 = sbr.rel (0) target = $region17
    $region16: #{tpu_custom_call.1} parent=1 // pred_region
      %s22 = ssub.s32 12800, 12800
      %23 = vsyncadd [#allocation3], %s22
      %s24 = sshll.u32 [#allocation2], 4
      %s25 = int_to_ptr.vmem [resolvable:$true] %s24
      %30 = dma.hbm_to_vmem [thread:$0]  %s3, 12800, %s25, [#allocation3], 256, 256, 16
    $region17: #{tpu_custom_call.1} parent=1 // pred_fallthru
      _
    // Predicated region
    $region18: #{tpu_custom_call.1} parent=1 // pred_check
      _
    $region19: #{tpu_custom_call.1} parent=1 // pred_check_branch
      %32 = sbr.rel (0) target = $region21
    $region20: #{tpu_custom_call.1} parent=1 // pred_region
      _
    $region21: #{tpu_custom_call.1} parent=1 // pred_fallthru
      _
    // Predicated region
    $region22: #{tpu_custom_call.1} parent=1 // pred_check
      _
    $region23: #{tpu_custom_call.1} parent=1 // pred_check_branch
      %34 = sbr.rel (0) target = $region25
    $region24: #{tpu_custom_call.1} parent=1 // pred_region
      _
    $region25: #{tpu_custom_call.1} parent=1 // pred_fallthru
      _
    // Predicated region
    $region26: #{tpu_custom_call.1} parent=1 // pred_check
      _
    $region27: #{tpu_custom_call.1} parent=1 // pred_check_branch
      %36 = sbr.rel (0) target = $region29
    $region28: #{tpu_custom_call.1} parent=1 // pred_region
      _
    $region29: #{tpu_custom_call.1} parent=1 // pred_fallthru
      _
    // Predicated region
    $region30: #{tpu_custom_call.1} parent=1 // pred_check
      _
    $region31: #{tpu_custom_call.1} parent=1 // pred_check_branch
      %38 = sbr.rel (0) target = $region33
    $region32: #{tpu_custom_call.1} parent=1 // pred_region
      %39 = dma.done [#allocation3], 12800
    $region33: #{tpu_custom_call.1} parent=1 // pred_fallthru
      _
    %v41 = vld [vmem:[%s0] sm:$0xf]
    %v42 = vld [vmem:[%s0 + $0x4] sm:$0xf]
    %v43 = vld [vmem:[%s0 + $0x8] sm:$0xf]
    %v44 = vld [vmem:[%s0 + $0xc] sm:$0xf]
    %v45 = vld [vmem:[%s0 + $0x10] sm:$0xf]
    %v46 = vld [vmem:[%s0 + $0x14] sm:$0xf]
    %v47 = vld [vmem:[%s0 + $0x18] sm:$0xf]
    %v48 = vld [vmem:[%s0 + $0x1c] sm:$0xf]
    %v49 = vld [vmem:[%s0 + $0x20] sm:$0xf]
    %v50 = vld [vmem:[%s0 + $0x24] sm:$0xf]
    %v51 = vld [vmem:[%s0 + $0x28] sm:$0xf]
    %v52 = vld [vmem:[%s0 + $0x2c] sm:$0xf]
    %v53 = vld [vmem:[%s0 + $0x30] sm:$0xf]
    %v54 = vld [vmem:[%s0 + $0x34] sm:$0xf]
    %v55 = vld [vmem:[%s0 + $0x38] sm:$0xf]
    %v56 = vld [vmem:[%s0 + $0x3c] sm:$0xf]
    %v57 = vld [vmem:[%s1] sm:$0x77]
    %v58 = vld [vmem:[%s1 + $0x8] sm:$0x77]
    %v59 = vld [vmem:[%s2] sm:$0xf]
    %v61 = vlaneseq
    %v62 = vshrl.u32 %v61, 7
    %v63 = vsub.s32 0, %v62
    %v64 = vrot.slane %v59, %v63
    %v65 = vlaneseq
    %v66 = vshrl.u32 %v65, 7
    %v67 = vsub.s32 1, %v66
    %v68 = vrot.slane %v59, %v67
    %v69 = vlaneseq
    %v70 = vshrl.u32 %v69, 7
    %v71 = vsub.s32 2, %v70
    %v72 = vrot.slane %v59, %v71
    %v73 = vlaneseq
    %v74 = vshrl.u32 %v73, 7
    %v75 = vsub.s32 3, %v74
    %v76 = vrot.slane %v59, %v75
    %v97 = vunpack.c.l.b16 %v41
    %v98 = vunpack.c.l.b16 %v42
    %v99 = vunpack.c.l.b16 %v43
    %v100 = vunpack.c.l.b16 %v44
    %v101 = vunpack.c.l.b16 %v45
    %v102 = vunpack.c.l.b16 %v46
    %v103 = vunpack.c.l.b16 %v47
    %v104 = vunpack.c.l.b16 %v48
    %v105 = vunpack.c.l.b16 %v49
    %v106 = vunpack.c.l.b16 %v50
    %v107 = vunpack.c.l.b16 %v51
    %v108 = vunpack.c.l.b16 %v52
    %v109 = vunpack.c.l.b16 %v53
    %v110 = vunpack.c.l.b16 %v54
    %v111 = vunpack.c.l.b16 %v55
    %v112 = vunpack.c.l.b16 %v56
    %v113 = vpack.c.b16 %v98, %v97
    %v114 = vpack.c.b16 %v100, %v99
    %v115 = vpack.c.b16 %v102, %v101
    %v116 = vpack.c.b16 %v104, %v103
    %v117 = vpack.c.b16 %v106, %v105
    %v118 = vpack.c.b16 %v108, %v107
    %v119 = vpack.c.b16 %v110, %v109
    %v120 = vpack.c.b16 %v112, %v111
    %v123 = vunpack.c.l.b16 %v57
    %v124 = vunpack.c.h.b16 %v57
    %v125 = vunpack.c.l.b16 %v58
    %v126 = vunpack.c.h.b16 %v58
    %v127 = vpack.c.b16 %v123, %v123
    %v128 = vpack.c.b16 %v124, %v124
    %v129 = vpack.c.b16 %v125, %v125
    %v130 = vpack.c.b16 %v126, %v126
    %vm131 = vcmask 39936
    %v133 = vsel %vm131, %v113, 0
    %v136 = vsel %vm131, %v114, 0
    %v139 = vsel %vm131, %v115, 0
    %v142 = vsel %vm131, %v116, 0
    %v145 = vsel %vm131, %v117, 0
    %v148 = vsel %vm131, %v118, 0
    %v151 = vsel %vm131, %v119, 0
    %v154 = vsel %vm131, %v120, 0
    %vm156 = vcmask 1041408
    %vm157 = vcmask 1042432
    %v158 = vsel %vm156, 4294967295, 65535
    %v159 = vsel %vm157, %v158, 0
    %v161 = vand.u32 %v127, %v159
    %v164 = vand.u32 %v128, %v159
    %v167 = vand.u32 %v129, %v159
    %v170 = vand.u32 %v130, %v159
    %172 = vmatprep.subr.bf16.mxu0 %v164
    %173 = vmatpush1.bf16.msra.mxu0 %v161
    %174 = vmatprep.subr.bf16.mxu0 0
    %175 = vmatpush1.bf16.msra.mxu0 0
    %176 = vmatprep.subr.bf16.mxu0 0
    %177 = vmatpush1.bf16.msra.mxu0 0
    %178 = vmatprep.subr.bf16.mxu0 0
    %179 = vmatpush1.bf16.msra.mxu0 0
    %180 = vmatprep.subr.bf16.mxu0 0
    %181 = vmatpush1.bf16.msra.mxu0 0
    %182 = vmatprep.subr.bf16.mxu0 0
    %183 = vmatpush1.bf16.msra.mxu0 0
    %184 = vmatprep.subr.bf16.mxu0 0
    %185 = vmatpush1.bf16.msra.mxu0 0
    %186 = vmatprep.subr.bf16.mxu0 0
    %187 = vmatpush1.bf16.msra.mxu0 0
    %188 = vmatprep.subr.bf16.mxu0 0
    %189 = vmatpush1.bf16.msra.mxu0 0
    %190 = vmatprep.subr.bf16.mxu0 0
    %191 = vmatpush1.bf16.msra.mxu0 0
    %192 = vmatprep.subr.bf16.mxu0 0
    %193 = vmatpush1.bf16.msra.mxu0 0
    %194 = vmatprep.subr.bf16.mxu0 0
    %195 = vmatpush1.bf16.msra.mxu0 0
    %196 = vmatprep.subr.bf16.mxu0 0
    %197 = vmatpush1.bf16.msra.mxu0 0
    %198 = vmatprep.subr.bf16.mxu0 0
    %199 = vmatpush1.bf16.msra.mxu0 0
    %200 = vmatprep.subr.bf16.mxu0 0
    %201 = vmatpush1.bf16.msra.mxu0 0
    %202 = vmatprep.subr.bf16.mxu0 0
    %203 = vmatpush1.bf16.msra.mxu0 0
    %204 = vmatprep.mubr.bf16.mxu0 0
    %205 = vmatmul.mubr.bf16.gmra.mrb[0].mxu0 %v133
    %v206 = vpop.f32.mrb[0].mxu0
    %v207 = vadd.f32 %v64, %v206
    %v208 = vpop.f32.mrb[0].mxu0
    %v209 = vadd.f32 %v68, %v208
    %v210 = vpop.f32.mrb[0].mxu0
    %v211 = vadd.f32 %v64, %v210
    %v212 = vpop.f32.mrb[0].mxu0
    %v213 = vadd.f32 %v68, %v212
    %214 = vmatprep.mubr.bf16.mxu0 0
    %215 = vmatmul.mubr.bf16.gmra.mrb[0].mxu0 %v136
    %v216 = vpop.f32.mrb[0].mxu0
    %v217 = vadd.f32 %v64, %v216
    %v218 = vpop.f32.mrb[0].mxu0
    %v219 = vadd.f32 %v68, %v218
    %v220 = vpop.f32.mrb[0].mxu0
    %v221 = vadd.f32 %v64, %v220
    %v222 = vpop.f32.mrb[0].mxu0
    %v223 = vadd.f32 %v68, %v222
    %224 = vmatprep.mubr.bf16.mxu0 0
    %225 = vmatmul.mubr.bf16.gmra.mrb[0].mxu0 %v139
    %v226 = vpop.f32.mrb[0].mxu0
    %v227 = vadd.f32 %v64, %v226
    %v228 = vpop.f32.mrb[0].mxu0
    %v229 = vadd.f32 %v68, %v228
    %v230 = vpop.f32.mrb[0].mxu0
    %v231 = vadd.f32 %v64, %v230
    %v232 = vpop.f32.mrb[0].mxu0
    %v233 = vadd.f32 %v68, %v232
    %234 = vmatprep.mubr.bf16.mxu0 0
    %235 = vmatmul.mubr.bf16.gmra.mrb[0].mxu0 %v142
    %v236 = vpop.f32.mrb[0].mxu0
    %v237 = vadd.f32 %v64, %v236
    %v238 = vpop.f32.mrb[0].mxu0
    %v239 = vadd.f32 %v68, %v238
    %v240 = vpop.f32.mrb[0].mxu0
    %v241 = vadd.f32 %v64, %v240
    %v242 = vpop.f32.mrb[0].mxu0
    %v243 = vadd.f32 %v68, %v242
    %244 = vmatprep.mubr.bf16.mxu0 0
    %245 = vmatmul.mubr.bf16.gmra.mrb[0].mxu0 %v145
    %v246 = vpop.f32.mrb[0].mxu0
    %v247 = vadd.f32 %v64, %v246
    %v248 = vpop.f32.mrb[0].mxu0
    %v249 = vadd.f32 %v68, %v248
    %v250 = vpop.f32.mrb[0].mxu0
    %v251 = vadd.f32 %v64, %v250
    %v252 = vpop.f32.mrb[0].mxu0
    %v253 = vadd.f32 %v68, %v252
    %254 = vmatprep.mubr.bf16.mxu0 0
    %255 = vmatmul.mubr.bf16.gmra.mrb[0].mxu0 %v148
    %v256 = vpop.f32.mrb[0].mxu0
    %v257 = vadd.f32 %v64, %v256
    %v258 = vpop.f32.mrb[0].mxu0
    %v259 = vadd.f32 %v68, %v258
    %v260 = vpop.f32.mrb[0].mxu0
    %v261 = vadd.f32 %v64, %v260
    %v262 = vpop.f32.mrb[0].mxu0
    %v263 = vadd.f32 %v68, %v262
    %264 = vmatprep.mubr.bf16.mxu0 0
    %265 = vmatmul.mubr.bf16.gmra.mrb[0].mxu0 %v151
    %v266 = vpop.f32.mrb[0].mxu0
    %v267 = vadd.f32 %v64, %v266
    %v268 = vpop.f32.mrb[0].mxu0
    %v269 = vadd.f32 %v68, %v268
    %v270 = vpop.f32.mrb[0].mxu0
    %v271 = vadd.f32 %v64, %v270
    %v272 = vpop.f32.mrb[0].mxu0
    %v273 = vadd.f32 %v68, %v272
    %274 = vmatprep.mubr.bf16.mxu0 0
    %275 = vmatmul.mubr.bf16.gmra.mrb[0].mxu0 %v154
    %v276 = vpop.f32.mrb[0].mxu0
    %v277 = vadd.f32 %v64, %v276
    %v278 = vpop.f32.mrb[0].mxu0
    %v279 = vadd.f32 %v68, %v278
    %v280 = vpop.f32.mrb[0].mxu0
    %v281 = vadd.f32 %v64, %v280
    %v282 = vpop.f32.mrb[0].mxu0
    %v283 = vadd.f32 %v68, %v282
    %284 = vdwg.mxu0
    %285 = vmatprep.subr.bf16.mxu0 %v170
    %286 = vmatpush1.bf16.msra.mxu0 %v167
    %287 = vmatprep.subr.bf16.mxu0 0
    %288 = vmatpush1.bf16.msra.mxu0 0
    %289 = vmatprep.subr.bf16.mxu0 0
    %290 = vmatpush1.bf16.msra.mxu0 0
    %291 = vmatprep.subr.bf16.mxu0 0
    %292 = vmatpush1.bf16.msra.mxu0 0
    %293 = vmatprep.subr.bf16.mxu0 0
    %294 = vmatpush1.bf16.msra.mxu0 0
    %295 = vmatprep.subr.bf16.mxu0 0
    %296 = vmatpush1.bf16.msra.mxu0 0
    %297 = vmatprep.subr.bf16.mxu0 0
    %298 = vmatpush1.bf16.msra.mxu0 0
    %299 = vmatprep.subr.bf16.mxu0 0
    %300 = vmatpush1.bf16.msra.mxu0 0
    %301 = vmatprep.subr.bf16.mxu0 0
    %302 = vmatpush1.bf16.msra.mxu0 0
    %303 = vmatprep.subr.bf16.mxu0 0
    %304 = vmatpush1.bf16.msra.mxu0 0
    %305 = vmatprep.subr.bf16.mxu0 0
    %306 = vmatpush1.bf16.msra.mxu0 0
    %307 = vmatprep.subr.bf16.mxu0 0
    %308 = vmatpush1.bf16.msra.mxu0 0
    %309 = vmatprep.subr.bf16.mxu0 0
    %310 = vmatpush1.bf16.msra.mxu0 0
    %311 = vmatprep.subr.bf16.mxu0 0
    %312 = vmatpush1.bf16.msra.mxu0 0
    %313 = vmatprep.subr.bf16.mxu0 0
    %314 = vmatpush1.bf16.msra.mxu0 0
    %315 = vmatprep.subr.bf16.mxu0 0
    %316 = vmatpush1.bf16.msra.mxu0 0
    %317 = vmatprep.mubr.bf16.mxu0 0
    %318 = vmatmul.mubr.bf16.gmra.mrb[0].mxu0 %v133
    %v319 = vpop.f32.mrb[0].mxu0
    %v320 = vadd.f32 %v72, %v319
    %v321 = vpop.f32.mrb[0].mxu0
    %v322 = vadd.f32 %v76, %v321
    %v323 = vpop.f32.mrb[0].mxu0
    %v324 = vadd.f32 %v72, %v323
    %v325 = vpop.f32.mrb[0].mxu0
    %v326 = vadd.f32 %v76, %v325
    %327 = vmatprep.mubr.bf16.mxu0 0
    %328 = vmatmul.mubr.bf16.gmra.mrb[0].mxu0 %v136
    %v329 = vpop.f32.mrb[0].mxu0
    %v330 = vadd.f32 %v72, %v329
    %v331 = vpop.f32.mrb[0].mxu0
    %v332 = vadd.f32 %v76, %v331
    %v333 = vpop.f32.mrb[0].mxu0
    %v334 = vadd.f32 %v72, %v333
    %v335 = vpop.f32.mrb[0].mxu0
    %v336 = vadd.f32 %v76, %v335
    %337 = vmatprep.mubr.bf16.mxu0 0
    %338 = vmatmul.mubr.bf16.gmra.mrb[0].mxu0 %v139
    %v339 = vpop.f32.mrb[0].mxu0
    %v340 = vadd.f32 %v72, %v339
    %v341 = vpop.f32.mrb[0].mxu0
    %v342 = vadd.f32 %v76, %v341
    %v343 = vpop.f32.mrb[0].mxu0
    %v344 = vadd.f32 %v72, %v343
    %v345 = vpop.f32.mrb[0].mxu0
    %v346 = vadd.f32 %v76, %v345
    %347 = vmatprep.mubr.bf16.mxu0 0
    %348 = vmatmul.mubr.bf16.gmra.mrb[0].mxu0 %v142
    %v349 = vpop.f32.mrb[0].mxu0
    %v350 = vadd.f32 %v72, %v349
    %v351 = vpop.f32.mrb[0].mxu0
    %v352 = vadd.f32 %v76, %v351
    %v353 = vpop.f32.mrb[0].mxu0
    %v354 = vadd.f32 %v72, %v353
    %v355 = vpop.f32.mrb[0].mxu0
    %v356 = vadd.f32 %v76, %v355
    %357 = vmatprep.mubr.bf16.mxu0 0
    %358 = vmatmul.mubr.bf16.gmra.mrb[0].mxu0 %v145
    %v359 = vpop.f32.mrb[0].mxu0
    %v360 = vadd.f32 %v72, %v359
    %v361 = vpop.f32.mrb[0].mxu0
    %v362 = vadd.f32 %v76, %v361
    %v363 = vpop.f32.mrb[0].mxu0
    %v364 = vadd.f32 %v72, %v363
    %v365 = vpop.f32.mrb[0].mxu0
    %v366 = vadd.f32 %v76, %v365
    %367 = vmatprep.mubr.bf16.mxu0 0
    %368 = vmatmul.mubr.bf16.gmra.mrb[0].mxu0 %v148
    %v369 = vpop.f32.mrb[0].mxu0
    %v370 = vadd.f32 %v72, %v369
    %v371 = vpop.f32.mrb[0].mxu0
    %v372 = vadd.f32 %v76, %v371
    %v373 = vpop.f32.mrb[0].mxu0
    %v374 = vadd.f32 %v72, %v373
    %v375 = vpop.f32.mrb[0].mxu0
    %v376 = vadd.f32 %v76, %v375
    %377 = vmatprep.mubr.bf16.mxu0 0
    %378 = vmatmul.mubr.bf16.gmra.mrb[0].mxu0 %v151
    %v379 = vpop.f32.mrb[0].mxu0
    %v380 = vadd.f32 %v72, %v379
    %v381 = vpop.f32.mrb[0].mxu0
    %v382 = vadd.f32 %v76, %v381
    %v383 = vpop.f32.mrb[0].mxu0
    %v384 = vadd.f32 %v72, %v383
    %v385 = vpop.f32.mrb[0].mxu0
    %v386 = vadd.f32 %v76, %v385
    %387 = vmatprep.mubr.bf16.mxu0 0
    %388 = vmatmul.mubr.bf16.gmra.mrb[0].mxu0 %v154
    %v389 = vpop.f32.mrb[0].mxu0
    %v390 = vadd.f32 %v72, %v389
    %v391 = vpop.f32.mrb[0].mxu0
    %v392 = vadd.f32 %v76, %v391
    %v393 = vpop.f32.mrb[0].mxu0
    %v394 = vadd.f32 %v72, %v393
    %v395 = vpop.f32.mrb[0].mxu0
    %v396 = vadd.f32 %v76, %v395
    %397 = vdwg.mxu0
    %v398 = vtanh.pop %v207
    %v399 = vtanh.pop %v209
    %v400 = vtanh.pop %v320
    %v401 = vtanh.pop %v322
    %v402 = vtanh.pop %v211
    %v403 = vtanh.pop %v213
    %v404 = vtanh.pop %v324
    %v405 = vtanh.pop %v326
    %v406 = vtanh.pop %v217
    %v407 = vtanh.pop %v219
    %v408 = vtanh.pop %v330
    %v409 = vtanh.pop %v332
    %v410 = vtanh.pop %v221
    %v411 = vtanh.pop %v223
    %v412 = vtanh.pop %v334
    %v413 = vtanh.pop %v336
    %v414 = vtanh.pop %v227
    %v415 = vtanh.pop %v229
    %v416 = vtanh.pop %v340
    %v417 = vtanh.pop %v342
    %v418 = vtanh.pop %v231
    %v419 = vtanh.pop %v233
    %v420 = vtanh.pop %v344
    %v421 = vtanh.pop %v346
    %v422 = vtanh.pop %v237
    %v423 = vtanh.pop %v239
    %v424 = vtanh.pop %v350
    %v425 = vtanh.pop %v352
    %v426 = vtanh.pop %v241
    %v427 = vtanh.pop %v243
    %v428 = vtanh.pop %v354
    %v429 = vtanh.pop %v356
    %v430 = vtanh.pop %v247
    %v431 = vtanh.pop %v249
    %v432 = vtanh.pop %v360
    %v433 = vtanh.pop %v362
    %v434 = vtanh.pop %v251
    %v435 = vtanh.pop %v253
    %v436 = vtanh.pop %v364
    %v437 = vtanh.pop %v366
    %v438 = vtanh.pop %v257
    %v439 = vtanh.pop %v259
    %v440 = vtanh.pop %v370
    %v441 = vtanh.pop %v372
    %v442 = vtanh.pop %v261
    %v443 = vtanh.pop %v263
    %v444 = vtanh.pop %v374
    %v445 = vtanh.pop %v376
    %v446 = vtanh.pop %v267
    %v447 = vtanh.pop %v269
    %v448 = vtanh.pop %v380
    %v449 = vtanh.pop %v382
    %v450 = vtanh.pop %v271
    %v451 = vtanh.pop %v273
    %v452 = vtanh.pop %v384
    %v453 = vtanh.pop %v386
    %v454 = vtanh.pop %v277
    %v455 = vtanh.pop %v279
    %v456 = vtanh.pop %v390
    %v457 = vtanh.pop %v392
    %v458 = vtanh.pop %v281
    %v459 = vtanh.pop %v283
    %v460 = vtanh.pop %v394
    %v461 = vtanh.pop %v396
    %v462 = vpack.c.bf16 %v402, %v398
    %v463 = vpack.c.bf16 %v403, %v399
    %v464 = vpack.c.bf16 %v404, %v400
    %v465 = vpack.c.bf16 %v405, %v401
    %v466 = vpack.c.bf16 %v410, %v406
    %v467 = vpack.c.bf16 %v411, %v407
    %v468 = vpack.c.bf16 %v412, %v408
    %v469 = vpack.c.bf16 %v413, %v409
    %v470 = vpack.c.bf16 %v418, %v414
    %v471 = vpack.c.bf16 %v419, %v415
    %v472 = vpack.c.bf16 %v420, %v416
    %v473 = vpack.c.bf16 %v421, %v417
    %v474 = vpack.c.bf16 %v426, %v422
    %v475 = vpack.c.bf16 %v427, %v423
    %v476 = vpack.c.bf16 %v428, %v424
    %v477 = vpack.c.bf16 %v429, %v425
    %v478 = vpack.c.bf16 %v434, %v430
    %v479 = vpack.c.bf16 %v435, %v431
    %v480 = vpack.c.bf16 %v436, %v432
    %v481 = vpack.c.bf16 %v437, %v433
    %v482 = vpack.c.bf16 %v442, %v438
    %v483 = vpack.c.bf16 %v443, %v439
    %v484 = vpack.c.bf16 %v444, %v440
    %v485 = vpack.c.bf16 %v445, %v441
    %v486 = vpack.c.bf16 %v450, %v446
    %v487 = vpack.c.bf16 %v451, %v447
    %v488 = vpack.c.bf16 %v452, %v448
    %v489 = vpack.c.bf16 %v453, %v449
    %v490 = vpack.c.bf16 %v458, %v454
    %v491 = vpack.c.bf16 %v459, %v455
    %v492 = vpack.c.bf16 %v460, %v456
    %v493 = vpack.c.bf16 %v461, %v457
    %v494 = vld [vmem:[#allocation2] sm:$0xff]
    %v495 = vld [vmem:[#allocation2 + $0x8] sm:$0xff]
    %v496 = vld [vmem:[#allocation2 + $0x10] sm:$0xff]
    %v497 = vld [vmem:[#allocation2 + $0x18] sm:$0xff]
    %v498 = vld [vmem:[#allocation2 + $0x20] sm:$0xff]
    %v499 = vld [vmem:[#allocation2 + $0x28] sm:$0xff]
    %v500 = vld [vmem:[#allocation2 + $0x30] sm:$0xff]
    %v501 = vld [vmem:[#allocation2 + $0x38] sm:$0xff]
    %v502 = vld [vmem:[#allocation2 + $0x40] sm:$0xff]
    %v503 = vld [vmem:[#allocation2 + $0x48] sm:$0xff]
    %v504 = vld [vmem:[#allocation2 + $0x50] sm:$0xff]
    %v505 = vld [vmem:[#allocation2 + $0x58] sm:$0xff]
    %v506 = vld [vmem:[#allocation2 + $0x60] sm:$0xff]
    %v507 = vld [vmem:[#allocation2 + $0x68] sm:$0xff]
    %v508 = vld [vmem:[#allocation2 + $0x70] sm:$0xff]
    %v509 = vld [vmem:[#allocation2 + $0x78] sm:$0xff]
    %v510 = vld [vmem:[#allocation2 + $0x80] sm:$0xff]
    %v511 = vld [vmem:[#allocation2 + $0x88] sm:$0xff]
    %v512 = vld [vmem:[#allocation2 + $0x90] sm:$0xff]
    %v513 = vld [vmem:[#allocation2 + $0x98] sm:$0xff]
    %v514 = vld [vmem:[#allocation2 + $0xa0] sm:$0xff]
    %v515 = vld [vmem:[#allocation2 + $0xa8] sm:$0xff]
    %v516 = vld [vmem:[#allocation2 + $0xb0] sm:$0xff]
    %v517 = vld [vmem:[#allocation2 + $0xb8] sm:$0xff]
    %v518 = vld [vmem:[#allocation2 + $0xc0] sm:$0xff]
    %v519 = vld [vmem:[#allocation2 + $0xc8] sm:$0xff]
    %v520 = vld [vmem:[#allocation2 + $0xd0] sm:$0xff]
    %v521 = vld [vmem:[#allocation2 + $0xd8] sm:$0xff]
    %v522 = vld [vmem:[#allocation2 + $0xe0] sm:$0xff]
    %v523 = vld [vmem:[#allocation2 + $0xe8] sm:$0xff]
    %v524 = vld [vmem:[#allocation2 + $0xf0] sm:$0xff]
    %v525 = vld [vmem:[#allocation2 + $0xf8] sm:$0xff]
    %v526 = vld [vmem:[#allocation2 + $0x100] sm:$0xff]
    %v527 = vld [vmem:[#allocation2 + $0x108] sm:$0xff]
    %v528 = vld [vmem:[#allocation2 + $0x110] sm:$0xff]
    %v529 = vld [vmem:[#allocation2 + $0x118] sm:$0xff]
    %v530 = vld [vmem:[#allocation2 + $0x120] sm:$0xff]
    %v531 = vld [vmem:[#allocation2 + $0x128] sm:$0xff]
    %v532 = vld [vmem:[#allocation2 + $0x130] sm:$0xff]
    %v533 = vld [vmem:[#allocation2 + $0x138] sm:$0xff]
    %v534 = vld [vmem:[#allocation2 + $0x140] sm:$0xff]
    %v535 = vld [vmem:[#allocation2 + $0x148] sm:$0xff]
    %v536 = vld [vmem:[#allocation2 + $0x150] sm:$0xff]
    %v537 = vld [vmem:[#allocation2 + $0x158] sm:$0xff]
    %v538 = vld [vmem:[#allocation2 + $0x160] sm:$0xff]
    %v539 = vld [vmem:[#allocation2 + $0x168] sm:$0xff]
    %v540 = vld [vmem:[#allocation2 + $0x170] sm:$0xff]
    %v541 = vld [vmem:[#allocation2 + $0x178] sm:$0xff]
    %v542 = vld [vmem:[#allocation2 + $0x180] sm:$0xff]
    %v543 = vld [vmem:[#allocation2 + $0x188] sm:$0xff]
    %v544 = vld [vmem:[#allocation2 + $0x190] sm:$0xff]
    %v545 = vld [vmem:[#allocation2 + $0x198] sm:$0xff]
    %v546 = vld [vmem:[#allocation2 + $0x1a0] sm:$0xff]
    %v547 = vld [vmem:[#allocation2 + $0x1a8] sm:$0xff]
    %v548 = vld [vmem:[#allocation2 + $0x1b0] sm:$0xff]
    %v549 = vld [vmem:[#allocation2 + $0x1b8] sm:$0xff]
    %v550 = vld [vmem:[#allocation2 + $0x1c0] sm:$0xff]
    %v551 = vld [vmem:[#allocation2 + $0x1c8] sm:$0xff]
    %v552 = vld [vmem:[#allocation2 + $0x1d0] sm:$0xff]
    %v553 = vld [vmem:[#allocation2 + $0x1d8] sm:$0xff]
    %v554 = vld [vmem:[#allocation2 + $0x1e0] sm:$0xff]
    %v555 = vld [vmem:[#allocation2 + $0x1e8] sm:$0xff]
    %v556 = vld [vmem:[#allocation2 + $0x1f0] sm:$0xff]
    %v557 = vld [vmem:[#allocation2 + $0x1f8] sm:$0xff]
    %v558 = vld [vmem:[#allocation2 + $0x200] sm:$0xff]
    %v559 = vld [vmem:[#allocation2 + $0x208] sm:$0xff]
    %v560 = vld [vmem:[#allocation2 + $0x210] sm:$0xff]
    %v561 = vld [vmem:[#allocation2 + $0x218] sm:$0xff]
    %v562 = vld [vmem:[#allocation2 + $0x220] sm:$0xff]
    %v563 = vld [vmem:[#allocation2 + $0x228] sm:$0xff]
    %v564 = vld [vmem:[#allocation2 + $0x230] sm:$0xff]
    %v565 = vld [vmem:[#allocation2 + $0x238] sm:$0xff]
    %v566 = vld [vmem:[#allocation2 + $0x240] sm:$0xff]
    %v567 = vld [vmem:[#allocation2 + $0x248] sm:$0xff]
    %v568 = vld [vmem:[#allocation2 + $0x250] sm:$0xff]
    %v569 = vld [vmem:[#allocation2 + $0x258] sm:$0xff]
    %v570 = vld [vmem:[#allocation2 + $0x260] sm:$0xff]
    %v571 = vld [vmem:[#allocation2 + $0x268] sm:$0xff]
    %v572 = vld [vmem:[#allocation2 + $0x270] sm:$0xff]
    %v573 = vld [vmem:[#allocation2 + $0x278] sm:$0xff]
    %v574 = vld [vmem:[#allocation2 + $0x280] sm:$0xff]
    %v575 = vld [vmem:[#allocation2 + $0x288] sm:$0xff]
    %v576 = vld [vmem:[#allocation2 + $0x290] sm:$0xff]
    %v577 = vld [vmem:[#allocation2 + $0x298] sm:$0xff]
    %v578 = vld [vmem:[#allocation2 + $0x2a0] sm:$0xff]
    %v579 = vld [vmem:[#allocation2 + $0x2a8] sm:$0xff]
    %v580 = vld [vmem:[#allocation2 + $0x2b0] sm:$0xff]
    %v581 = vld [vmem:[#allocation2 + $0x2b8] sm:$0xff]
    %v582 = vld [vmem:[#allocation2 + $0x2c0] sm:$0xff]
    %v583 = vld [vmem:[#allocation2 + $0x2c8] sm:$0xff]
    %v584 = vld [vmem:[#allocation2 + $0x2d0] sm:$0xff]
    %v585 = vld [vmem:[#allocation2 + $0x2d8] sm:$0xff]
    %v586 = vld [vmem:[#allocation2 + $0x2e0] sm:$0xff]
    %v587 = vld [vmem:[#allocation2 + $0x2e8] sm:$0xff]
    %v588 = vld [vmem:[#allocation2 + $0x2f0] sm:$0xff]
    %v589 = vld [vmem:[#allocation2 + $0x2f8] sm:$0xff]
    %v590 = vld [vmem:[#allocation2 + $0x300] sm:$0xff]
    %v591 = vld [vmem:[#allocation2 + $0x308] sm:$0xff]
    %v592 = vld [vmem:[#allocation2 + $0x310] sm:$0xff]
    %v593 = vld [vmem:[#allocation2 + $0x318] sm:$0xff]
    %v594 = vld [vmem:[%s4] sm:$0xf]
    %v596 = vlaneseq
    %v597 = vshrl.u32 %v596, 7
    %v598 = vsub.s32 0, %v597
    %v599 = vrot.slane %v594, %v598
    %v600 = vlaneseq
    %v601 = vshrl.u32 %v600, 7
    %v602 = vsub.s32 1, %v601
    %v603 = vrot.slane %v594, %v602
    %v604 = vlaneseq
    %v605 = vshrl.u32 %v604, 7
    %v606 = vsub.s32 2, %v605
    %v607 = vrot.slane %v594, %v606
    %v608 = vlaneseq
    %v609 = vshrl.u32 %v608, 7
    %v610 = vsub.s32 3, %v609
    %v611 = vrot.slane %v594, %v610
    %v716 = vunpack.c.l.b16 %v494
    %v717 = vunpack.c.h.b16 %v494
    %v718 = vunpack.c.l.b16 %v495
    %v719 = vunpack.c.h.b16 %v495
    %v720 = vunpack.c.l.b16 %v496
    %v721 = vunpack.c.h.b16 %v496
    %v722 = vunpack.c.l.b16 %v497
    %v723 = vunpack.c.h.b16 %v497
    %v724 = vunpack.c.l.b16 %v498
    %v725 = vunpack.c.h.b16 %v498
    %v726 = vunpack.c.l.b16 %v499
    %v727 = vunpack.c.h.b16 %v499
    %v728 = vunpack.c.l.b16 %v500
    %v729 = vunpack.c.h.b16 %v500
    %v730 = vunpack.c.l.b16 %v501
    %v731 = vunpack.c.h.b16 %v501
    %v732 = vunpack.c.l.b16 %v502
    %v733 = vunpack.c.h.b16 %v502
    %v734 = vunpack.c.l.b16 %v503
    %v735 = vunpack.c.h.b16 %v503
    %v736 = vunpack.c.l.b16 %v504
    %v737 = vunpack.c.h.b16 %v504
    %v738 = vunpack.c.l.b16 %v505
    %v739 = vunpack.c.h.b16 %v505
    %v740 = vunpack.c.l.b16 %v506
    %v741 = vunpack.c.h.b16 %v506
    %v742 = vunpack.c.l.b16 %v507
    %v743 = vunpack.c.h.b16 %v507
    %v744 = vunpack.c.l.b16 %v508
    %v745 = vunpack.c.h.b16 %v508
    %v746 = vunpack.c.l.b16 %v509
    %v747 = vunpack.c.h.b16 %v509
    %v748 = vunpack.c.l.b16 %v510
    %v749 = vunpack.c.h.b16 %v510
    %v750 = vunpack.c.l.b16 %v511
    %v751 = vunpack.c.h.b16 %v511
    %v752 = vunpack.c.l.b16 %v512
    %v753 = vunpack.c.h.b16 %v512
    %v754 = vunpack.c.l.b16 %v513
    %v755 = vunpack.c.h.b16 %v513
    %v756 = vunpack.c.l.b16 %v514
    %v757 = vunpack.c.h.b16 %v514
    %v758 = vunpack.c.l.b16 %v515
    %v759 = vunpack.c.h.b16 %v515
    %v760 = vunpack.c.l.b16 %v516
    %v761 = vunpack.c.h.b16 %v516
    %v762 = vunpack.c.l.b16 %v517
    %v763 = vunpack.c.h.b16 %v517
    %v764 = vunpack.c.l.b16 %v518
    %v765 = vunpack.c.h.b16 %v518
    %v766 = vunpack.c.l.b16 %v519
    %v767 = vunpack.c.h.b16 %v519
    %v768 = vunpack.c.l.b16 %v520
    %v769 = vunpack.c.h.b16 %v520
    %v770 = vunpack.c.l.b16 %v521
    %v771 = vunpack.c.h.b16 %v521
    %v772 = vunpack.c.l.b16 %v522
    %v773 = vunpack.c.h.b16 %v522
    %v774 = vunpack.c.l.b16 %v523
    %v775 = vunpack.c.h.b16 %v523
    %v776 = vunpack.c.l.b16 %v524
    %v777 = vunpack.c.h.b16 %v524
    %v778 = vunpack.c.l.b16 %v525
    %v779 = vunpack.c.h.b16 %v525
    %v780 = vunpack.c.l.b16 %v526
    %v781 = vunpack.c.h.b16 %v526
    %v782 = vunpack.c.l.b16 %v527
    %v783 = vunpack.c.h.b16 %v527
    %v784 = vunpack.c.l.b16 %v528
    %v785 = vunpack.c.h.b16 %v528
    %v786 = vunpack.c.l.b16 %v529
    %v787 = vunpack.c.h.b16 %v529
    %v788 = vunpack.c.l.b16 %v530
    %v789 = vunpack.c.h.b16 %v530
    %v790 = vunpack.c.l.b16 %v531
    %v791 = vunpack.c.h.b16 %v531
    %v792 = vunpack.c.l.b16 %v532
    %v793 = vunpack.c.h.b16 %v532
    %v794 = vunpack.c.l.b16 %v533
    %v795 = vunpack.c.h.b16 %v533
    %v796 = vunpack.c.l.b16 %v534
    %v797 = vunpack.c.h.b16 %v534
    %v798 = vunpack.c.l.b16 %v535
    %v799 = vunpack.c.h.b16 %v535
    %v800 = vunpack.c.l.b16 %v536
    %v801 = vunpack.c.h.b16 %v536
    %v802 = vunpack.c.l.b16 %v537
    %v803 = vunpack.c.h.b16 %v537
    %v804 = vunpack.c.l.b16 %v538
    %v805 = vunpack.c.h.b16 %v538
    %v806 = vunpack.c.l.b16 %v539
    %v807 = vunpack.c.h.b16 %v539
    %v808 = vunpack.c.l.b16 %v540
    %v809 = vunpack.c.h.b16 %v540
    %v810 = vunpack.c.l.b16 %v541
    %v811 = vunpack.c.h.b16 %v541
    %v812 = vunpack.c.l.b16 %v542
    %v813 = vunpack.c.h.b16 %v542
    %v814 = vunpack.c.l.b16 %v543
    %v815 = vunpack.c.h.b16 %v543
    %v816 = vunpack.c.l.b16 %v544
    %v817 = vunpack.c.h.b16 %v544
    %v818 = vunpack.c.l.b16 %v545
    %v819 = vunpack.c.h.b16 %v545
    %v820 = vunpack.c.l.b16 %v546
    %v821 = vunpack.c.h.b16 %v546
    %v822 = vunpack.c.l.b16 %v547
    %v823 = vunpack.c.h.b16 %v547
    %v824 = vunpack.c.l.b16 %v548
    %v825 = vunpack.c.h.b16 %v548
    %v826 = vunpack.c.l.b16 %v549
    %v827 = vunpack.c.h.b16 %v549
    %v828 = vunpack.c.l.b16 %v550
    %v829 = vunpack.c.h.b16 %v550
    %v830 = vunpack.c.l.b16 %v551
    %v831 = vunpack.c.h.b16 %v551
    %v832 = vunpack.c.l.b16 %v552
    %v833 = vunpack.c.h.b16 %v552
    %v834 = vunpack.c.l.b16 %v553
    %v835 = vunpack.c.h.b16 %v553
    %v836 = vunpack.c.l.b16 %v554
    %v837 = vunpack.c.h.b16 %v554
    %v838 = vunpack.c.l.b16 %v555
    %v839 = vunpack.c.h.b16 %v555
    %v840 = vunpack.c.l.b16 %v556
    %v841 = vunpack.c.h.b16 %v556
    %v842 = vunpack.c.l.b16 %v557
    %v843 = vunpack.c.h.b16 %v557
    %v844 = vunpack.c.l.b16 %v558
    %v845 = vunpack.c.h.b16 %v558
    %v846 = vunpack.c.l.b16 %v559
    %v847 = vunpack.c.h.b16 %v559
    %v848 = vunpack.c.l.b16 %v560
    %v849 = vunpack.c.h.b16 %v560
    %v850 = vunpack.c.l.b16 %v561
    %v851 = vunpack.c.h.b16 %v561
    %v852 = vunpack.c.l.b16 %v562
    %v853 = vunpack.c.h.b16 %v562
    %v854 = vunpack.c.l.b16 %v563
    %v855 = vunpack.c.h.b16 %v563
    %v856 = vunpack.c.l.b16 %v564
    %v857 = vunpack.c.h.b16 %v564
    %v858 = vunpack.c.l.b16 %v565
    %v859 = vunpack.c.h.b16 %v565
    %v860 = vunpack.c.l.b16 %v566
    %v861 = vunpack.c.h.b16 %v566
    %v862 = vunpack.c.l.b16 %v567
    %v863 = vunpack.c.h.b16 %v567
    %v864 = vunpack.c.l.b16 %v568
    %v865 = vunpack.c.h.b16 %v568
    %v866 = vunpack.c.l.b16 %v569
    %v867 = vunpack.c.h.b16 %v569
    %v868 = vunpack.c.l.b16 %v570
    %v869 = vunpack.c.h.b16 %v570
    %v870 = vunpack.c.l.b16 %v571
    %v871 = vunpack.c.h.b16 %v571
    %v872 = vunpack.c.l.b16 %v572
    %v873 = vunpack.c.h.b16 %v572
    %v874 = vunpack.c.l.b16 %v573
    %v875 = vunpack.c.h.b16 %v573
    %v876 = vunpack.c.l.b16 %v574
    %v877 = vunpack.c.h.b16 %v574
    %v878 = vunpack.c.l.b16 %v575
    %v879 = vunpack.c.h.b16 %v575
    %v880 = vunpack.c.l.b16 %v576
    %v881 = vunpack.c.h.b16 %v576
    %v882 = vunpack.c.l.b16 %v577
    %v883 = vunpack.c.h.b16 %v577
    %v884 = vunpack.c.l.b16 %v578
    %v885 = vunpack.c.h.b16 %v578
    %v886 = vunpack.c.l.b16 %v579
    %v887 = vunpack.c.h.b16 %v579
    %v888 = vunpack.c.l.b16 %v580
    %v889 = vunpack.c.h.b16 %v580
    %v890 = vunpack.c.l.b16 %v581
    %v891 = vunpack.c.h.b16 %v581
    %v892 = vunpack.c.l.b16 %v582
    %v893 = vunpack.c.h.b16 %v582
    %v894 = vunpack.c.l.b16 %v583
    %v895 = vunpack.c.h.b16 %v583
    %v896 = vunpack.c.l.b16 %v584
    %v897 = vunpack.c.h.b16 %v584
    %v898 = vunpack.c.l.b16 %v585
    %v899 = vunpack.c.h.b16 %v585
    %v900 = vunpack.c.l.b16 %v586
    %v901 = vunpack.c.h.b16 %v586
    %v902 = vunpack.c.l.b16 %v587
    %v903 = vunpack.c.h.b16 %v587
    %v904 = vunpack.c.l.b16 %v588
    %v905 = vunpack.c.h.b16 %v588
    %v906 = vunpack.c.l.b16 %v589
    %v907 = vunpack.c.h.b16 %v589
    %v908 = vunpack.c.l.b16 %v590
    %v909 = vunpack.c.h.b16 %v590
    %v910 = vunpack.c.l.b16 %v591
    %v911 = vunpack.c.h.b16 %v591
    %v912 = vunpack.c.l.b16 %v592
    %v913 = vunpack.c.h.b16 %v592
    %v914 = vunpack.c.l.b16 %v593
    %v915 = vunpack.c.h.b16 %v593
    %v916 = vpack.c.b16 %v720, %v716
    %v917 = vpack.c.b16 %v721, %v717
    %v918 = vpack.c.b16 %v722, %v718
    %v919 = vpack.c.b16 %v723, %v719
    %v920 = vpack.c.b16 %v728, %v724
    %v921 = vpack.c.b16 %v729, %v725
    %v922 = vpack.c.b16 %v730, %v726
    %v923 = vpack.c.b16 %v731, %v727
    %v924 = vpack.c.b16 %v736, %v732
    %v925 = vpack.c.b16 %v737, %v733
    %v926 = vpack.c.b16 %v738, %v734
    %v927 = vpack.c.b16 %v739, %v735
    %v928 = vpack.c.b16 %v744, %v740
    %v929 = vpack.c.b16 %v745, %v741
    %v930 = vpack.c.b16 %v746, %v742
    %v931 = vpack.c.b16 %v747, %v743
    %v932 = vpack.c.b16 %v752, %v748
    %v933 = vpack.c.b16 %v753, %v749
    %v934 = vpack.c.b16 %v754, %v750
    %v935 = vpack.c.b16 %v755, %v751
    %v936 = vpack.c.b16 %v760, %v756
    %v937 = vpack.c.b16 %v761, %v757
    %v938 = vpack.c.b16 %v762, %v758
    %v939 = vpack.c.b16 %v763, %v759
    %v940 = vpack.c.b16 %v768, %v764
    %v941 = vpack.c.b16 %v769, %v765
    %v942 = vpack.c.b16 %v770, %v766
    %v943 = vpack.c.b16 %v771, %v767
    %v944 = vpack.c.b16 %v776, %v772
    %v945 = vpack.c.b16 %v777, %v773
    %v946 = vpack.c.b16 %v778, %v774
    %v947 = vpack.c.b16 %v779, %v775
    %v948 = vpack.c.b16 %v784, %v780
    %v949 = vpack.c.b16 %v785, %v781
    %v950 = vpack.c.b16 %v786, %v782
    %v951 = vpack.c.b16 %v787, %v783
    %v952 = vpack.c.b16 %v792, %v788
    %v953 = vpack.c.b16 %v793, %v789
    %v954 = vpack.c.b16 %v794, %v790
    %v955 = vpack.c.b16 %v795, %v791
    %v956 = vpack.c.b16 %v800, %v796
    %v957 = vpack.c.b16 %v801, %v797
    %v958 = vpack.c.b16 %v802, %v798
    %v959 = vpack.c.b16 %v803, %v799
    %v960 = vpack.c.b16 %v808, %v804
    %v961 = vpack.c.b16 %v809, %v805
    %v962 = vpack.c.b16 %v810, %v806
    %v963 = vpack.c.b16 %v811, %v807
    %v964 = vpack.c.b16 %v816, %v812
    %v965 = vpack.c.b16 %v817, %v813
    %v966 = vpack.c.b16 %v818, %v814
    %v967 = vpack.c.b16 %v819, %v815
    %v968 = vpack.c.b16 %v824, %v820
    %v969 = vpack.c.b16 %v825, %v821
    %v970 = vpack.c.b16 %v826, %v822
    %v971 = vpack.c.b16 %v827, %v823
    %v972 = vpack.c.b16 %v832, %v828
    %v973 = vpack.c.b16 %v833, %v829
    %v974 = vpack.c.b16 %v834, %v830
    %v975 = vpack.c.b16 %v835, %v831
    %v976 = vpack.c.b16 %v840, %v836
    %v977 = vpack.c.b16 %v841, %v837
    %v978 = vpack.c.b16 %v842, %v838
    %v979 = vpack.c.b16 %v843, %v839
    %v980 = vpack.c.b16 %v848, %v844
    %v981 = vpack.c.b16 %v849, %v845
    %v982 = vpack.c.b16 %v850, %v846
    %v983 = vpack.c.b16 %v851, %v847
    %v984 = vpack.c.b16 %v856, %v852
    %v985 = vpack.c.b16 %v857, %v853
    %v986 = vpack.c.b16 %v858, %v854
    %v987 = vpack.c.b16 %v859, %v855
    %v988 = vpack.c.b16 %v864, %v860
    %v989 = vpack.c.b16 %v865, %v861
    %v990 = vpack.c.b16 %v866, %v862
    %v991 = vpack.c.b16 %v867, %v863
    %v992 = vpack.c.b16 %v872, %v868
    %v993 = vpack.c.b16 %v873, %v869
    %v994 = vpack.c.b16 %v874, %v870
    %v995 = vpack.c.b16 %v875, %v871
    %v996 = vpack.c.b16 %v880, %v876
    %v997 = vpack.c.b16 %v881, %v877
    %v998 = vpack.c.b16 %v882, %v878
    %v999 = vpack.c.b16 %v883, %v879
    %v1000 = vpack.c.b16 %v888, %v884
    %v1001 = vpack.c.b16 %v889, %v885
    %v1002 = vpack.c.b16 %v890, %v886
    %v1003 = vpack.c.b16 %v891, %v887
    %v1004 = vpack.c.b16 %v896, %v892
    %v1005 = vpack.c.b16 %v897, %v893
    %v1006 = vpack.c.b16 %v898, %v894
    %v1007 = vpack.c.b16 %v899, %v895
    %v1008 = vpack.c.b16 %v904, %v900
    %v1009 = vpack.c.b16 %v905, %v901
    %v1010 = vpack.c.b16 %v906, %v902
    %v1011 = vpack.c.b16 %v907, %v903
    %v1012 = vpack.c.b16 %v912, %v908
    %v1013 = vpack.c.b16 %v913, %v909
    %v1014 = vpack.c.b16 %v914, %v910
    %v1015 = vpack.c.b16 %v915, %v911
    %vm1116 = vcmask 130048
    %v1118 = vsel %vm1116, %v465, 0
    %v1121 = vsel %vm1116, %v469, 0
    %v1124 = vsel %vm1116, %v473, 0
    %v1127 = vsel %vm1116, %v477, 0
    %v1130 = vsel %vm1116, %v481, 0
    %v1133 = vsel %vm1116, %v485, 0
    %v1136 = vsel %vm1116, %v489, 0
    %v1139 = vsel %vm1116, %v493, 0
    %1141 = vmatprep.subr.bf16.mxu0 %v917
    %1142 = vmatpush1.bf16.msra.mxu0 %v916
    %1143 = vmatprep.subr.bf16.mxu0 %v921
    %1144 = vmatpush1.bf16.msra.mxu0 %v920
    %1145 = vmatprep.subr.bf16.mxu0 %v925
    %1146 = vmatpush1.bf16.msra.mxu0 %v924
    %1147 = vmatprep.subr.bf16.mxu0 %v929
    %1148 = vmatpush1.bf16.msra.mxu0 %v928
    %1149 = vmatprep.subr.bf16.mxu0 %v933
    %1150 = vmatpush1.bf16.msra.mxu0 %v932
    %1151 = vmatprep.subr.bf16.mxu0 %v937
    %1152 = vmatpush1.bf16.msra.mxu0 %v936
    %1153 = vmatprep.subr.bf16.mxu0 %v941
    %1154 = vmatpush1.bf16.msra.mxu0 %v940
    %1155 = vmatprep.subr.bf16.mxu0 %v945
    %1156 = vmatpush1.bf16.msra.mxu0 %v944
    %1157 = vmatprep.subr.bf16.mxu0 %v949
    %1158 = vmatpush1.bf16.msra.mxu0 %v948
    %1159 = vmatprep.subr.bf16.mxu0 %v953
    %1160 = vmatpush1.bf16.msra.mxu0 %v952
    %1161 = vmatprep.subr.bf16.mxu0 %v957
    %1162 = vmatpush1.bf16.msra.mxu0 %v956
    %1163 = vmatprep.subr.bf16.mxu0 %v961
    %1164 = vmatpush1.bf16.msra.mxu0 %v960
    %1165 = vmatprep.subr.bf16.mxu0 %v965
    %1166 = vmatpush1.bf16.msra.mxu0 %v964
    %1167 = vmatprep.subr.bf16.mxu0 %v969
    %1168 = vmatpush1.bf16.msra.mxu0 %v968
    %1169 = vmatprep.subr.bf16.mxu0 %v973
    %1170 = vmatpush1.bf16.msra.mxu0 %v972
    %1171 = vmatprep.subr.bf16.mxu0 %v977
    %1172 = vmatpush1.bf16.msra.mxu0 %v976
    %1173 = vmatprep.mubr.bf16.mxu0 %v463
    %1174 = vmatmul.mubr.bf16.gmra.mrb[0].mxu0 %v462
    %v1175 = vpop.f32.mrb[0].mxu0
    %v1176 = vadd.f32 %v599, %v1175
    %v1177 = vpop.f32.mrb[0].mxu0
    %v1178 = vadd.f32 %v603, %v1177
    %v1179 = vpop.f32.mrb[0].mxu0
    %v1180 = vadd.f32 %v599, %v1179
    %v1181 = vpop.f32.mrb[0].mxu0
    %v1182 = vadd.f32 %v603, %v1181
    %1183 = vmatprep.mubr.bf16.mxu0 %v467
    %1184 = vmatmul.mubr.bf16.gmra.mrb[0].mxu0 %v466
    %v1185 = vpop.f32.mrb[0].mxu0
    %v1186 = vadd.f32 %v599, %v1185
    %v1187 = vpop.f32.mrb[0].mxu0
    %v1188 = vadd.f32 %v603, %v1187
    %v1189 = vpop.f32.mrb[0].mxu0
    %v1190 = vadd.f32 %v599, %v1189
    %v1191 = vpop.f32.mrb[0].mxu0
    %v1192 = vadd.f32 %v603, %v1191
    %1193 = vmatprep.mubr.bf16.mxu0 %v471
    %1194 = vmatmul.mubr.bf16.gmra.mrb[0].mxu0 %v470
    %v1195 = vpop.f32.mrb[0].mxu0
    %v1196 = vadd.f32 %v599, %v1195
    %v1197 = vpop.f32.mrb[0].mxu0
    %v1198 = vadd.f32 %v603, %v1197
    %v1199 = vpop.f32.mrb[0].mxu0
    %v1200 = vadd.f32 %v599, %v1199
    %v1201 = vpop.f32.mrb[0].mxu0
    %v1202 = vadd.f32 %v603, %v1201
    %1203 = vmatprep.mubr.bf16.mxu0 %v475
    %1204 = vmatmul.mubr.bf16.gmra.mrb[0].mxu0 %v474
    %v1205 = vpop.f32.mrb[0].mxu0
    %v1206 = vadd.f32 %v599, %v1205
    %v1207 = vpop.f32.mrb[0].mxu0
    %v1208 = vadd.f32 %v603, %v1207
    %v1209 = vpop.f32.mrb[0].mxu0
    %v1210 = vadd.f32 %v599, %v1209
    %v1211 = vpop.f32.mrb[0].mxu0
    %v1212 = vadd.f32 %v603, %v1211
    %1213 = vmatprep.mubr.bf16.mxu0 %v479
    %1214 = vmatmul.mubr.bf16.gmra.mrb[0].mxu0 %v478
    %v1215 = vpop.f32.mrb[0].mxu0
    %v1216 = vadd.f32 %v599, %v1215
    %v1217 = vpop.f32.mrb[0].mxu0
    %v1218 = vadd.f32 %v603, %v1217
    %v1219 = vpop.f32.mrb[0].mxu0
    %v1220 = vadd.f32 %v599, %v1219
    %v1221 = vpop.f32.mrb[0].mxu0
    %v1222 = vadd.f32 %v603, %v1221
    %1223 = vmatprep.mubr.bf16.mxu0 %v483
    %1224 = vmatmul.mubr.bf16.gmra.mrb[0].mxu0 %v482
    %v1225 = vpop.f32.mrb[0].mxu0
    %v1226 = vadd.f32 %v599, %v1225
    %v1227 = vpop.f32.mrb[0].mxu0
    %v1228 = vadd.f32 %v603, %v1227
    %v1229 = vpop.f32.mrb[0].mxu0
    %v1230 = vadd.f32 %v599, %v1229
    %v1231 = vpop.f32.mrb[0].mxu0
    %v1232 = vadd.f32 %v603, %v1231
    %1233 = vmatprep.mubr.bf16.mxu0 %v487
    %1234 = vmatmul.mubr.bf16.gmra.mrb[0].mxu0 %v486
    %v1235 = vpop.f32.mrb[0].mxu0
    %v1236 = vadd.f32 %v599, %v1235
    %v1237 = vpop.f32.mrb[0].mxu0
    %v1238 = vadd.f32 %v603, %v1237
    %v1239 = vpop.f32.mrb[0].mxu0
    %v1240 = vadd.f32 %v599, %v1239
    %v1241 = vpop.f32.mrb[0].mxu0
    %v1242 = vadd.f32 %v603, %v1241
    %1243 = vmatprep.mubr.bf16.mxu0 %v491
    %1244 = vmatmul.mubr.bf16.gmra.mrb[0].mxu0 %v490
    %v1245 = vpop.f32.mrb[0].mxu0
    %v1246 = vadd.f32 %v599, %v1245
    %v1247 = vpop.f32.mrb[0].mxu0
    %v1248 = vadd.f32 %v603, %v1247
    %v1249 = vpop.f32.mrb[0].mxu0
    %v1250 = vadd.f32 %v599, %v1249
    %v1251 = vpop.f32.mrb[0].mxu0
    %v1252 = vadd.f32 %v603, %v1251
    %1253 = vdwg.mxu0
    %1254 = vmatprep.subr.bf16.mxu0 %v981
    %1255 = vmatpush1.bf16.msra.mxu0 %v980
    %1256 = vmatprep.subr.bf16.mxu0 %v985
    %1257 = vmatpush1.bf16.msra.mxu0 %v984
    %1258 = vmatprep.subr.bf16.mxu0 %v989
    %1259 = vmatpush1.bf16.msra.mxu0 %v988
    %1260 = vmatprep.subr.bf16.mxu0 %v993
    %1261 = vmatpush1.bf16.msra.mxu0 %v992
    %1262 = vmatprep.subr.bf16.mxu0 %v997
    %1263 = vmatpush1.bf16.msra.mxu0 %v996
    %1264 = vmatprep.subr.bf16.mxu0 %v1001
    %1265 = vmatpush1.bf16.msra.mxu0 %v1000
    %1266 = vmatprep.subr.bf16.mxu0 %v1005
    %1267 = vmatpush1.bf16.msra.mxu0 %v1004
    %1268 = vmatprep.subr.bf16.mxu0 %v1009
    %1269 = vmatpush1.bf16.msra.mxu0 %v1008
    %1270 = vmatprep.subr.bf16.mxu0 %v1013
    %1271 = vmatpush1.bf16.msra.mxu0 %v1012
    %1272 = vmatprep.subr.bf16.mxu0 0
    %1273 = vmatpush1.bf16.msra.mxu0 0
    %1274 = vmatprep.subr.bf16.mxu0 0
    %1275 = vmatpush1.bf16.msra.mxu0 0
    %1276 = vmatprep.subr.bf16.mxu0 0
    %1277 = vmatpush1.bf16.msra.mxu0 0
    %1278 = vmatprep.subr.bf16.mxu0 0
    %1279 = vmatpush1.bf16.msra.mxu0 0
    %1280 = vmatprep.subr.bf16.mxu0 0
    %1281 = vmatpush1.bf16.msra.mxu0 0
    %1282 = vmatprep.subr.bf16.mxu0 0
    %1283 = vmatpush1.bf16.msra.mxu0 0
    %1284 = vmatprep.subr.bf16.mxu0 0
    %1285 = vmatpush1.bf16.msra.mxu0 0
    %1286 = vmatprep.mubr.bf16.mxu0 %v1118
    %1287 = vmatmul.mubr.bf16.gmra.mrb[0].mxu0 %v464
    %v1288 = vpop.f32.mrb[0].mxu0
    %v1289 = vadd.f32 %v1176, %v1288
    %v1290 = vpop.f32.mrb[0].mxu0
    %v1291 = vadd.f32 %v1178, %v1290
    %v1292 = vpop.f32.mrb[0].mxu0
    %v1293 = vadd.f32 %v1180, %v1292
    %v1294 = vpop.f32.mrb[0].mxu0
    %v1295 = vadd.f32 %v1182, %v1294
    %1296 = vmatprep.mubr.bf16.mxu0 %v1121
    %1297 = vmatmul.mubr.bf16.gmra.mrb[0].mxu0 %v468
    %v1298 = vpop.f32.mrb[0].mxu0
    %v1299 = vadd.f32 %v1186, %v1298
    %v1300 = vpop.f32.mrb[0].mxu0
    %v1301 = vadd.f32 %v1188, %v1300
    %v1302 = vpop.f32.mrb[0].mxu0
    %v1303 = vadd.f32 %v1190, %v1302
    %v1304 = vpop.f32.mrb[0].mxu0
    %v1305 = vadd.f32 %v1192, %v1304
    %1306 = vmatprep.mubr.bf16.mxu0 %v1124
    %1307 = vmatmul.mubr.bf16.gmra.mrb[0].mxu0 %v472
    %v1308 = vpop.f32.mrb[0].mxu0
    %v1309 = vadd.f32 %v1196, %v1308
    %v1310 = vpop.f32.mrb[0].mxu0
    %v1311 = vadd.f32 %v1198, %v1310
    %v1312 = vpop.f32.mrb[0].mxu0
    %v1313 = vadd.f32 %v1200, %v1312
    %v1314 = vpop.f32.mrb[0].mxu0
    %v1315 = vadd.f32 %v1202, %v1314
    %1316 = vmatprep.mubr.bf16.mxu0 %v1127
    %1317 = vmatmul.mubr.bf16.gmra.mrb[0].mxu0 %v476
    %v1318 = vpop.f32.mrb[0].mxu0
    %v1319 = vadd.f32 %v1206, %v1318
    %v1320 = vpop.f32.mrb[0].mxu0
    %v1321 = vadd.f32 %v1208, %v1320
    %v1322 = vpop.f32.mrb[0].mxu0
    %v1323 = vadd.f32 %v1210, %v1322
    %v1324 = vpop.f32.mrb[0].mxu0
    %v1325 = vadd.f32 %v1212, %v1324
    %1326 = vmatprep.mubr.bf16.mxu0 %v1130
    %1327 = vmatmul.mubr.bf16.gmra.mrb[0].mxu0 %v480
    %v1328 = vpop.f32.mrb[0].mxu0
    %v1329 = vadd.f32 %v1216, %v1328
    %v1330 = vpop.f32.mrb[0].mxu0
    %v1331 = vadd.f32 %v1218, %v1330
    %v1332 = vpop.f32.mrb[0].mxu0
    %v1333 = vadd.f32 %v1220, %v1332
    %v1334 = vpop.f32.mrb[0].mxu0
    %v1335 = vadd.f32 %v1222, %v1334
    %1336 = vmatprep.mubr.bf16.mxu0 %v1133
    %1337 = vmatmul.mubr.bf16.gmra.mrb[0].mxu0 %v484
    %v1338 = vpop.f32.mrb[0].mxu0
    %v1339 = vadd.f32 %v1226, %v1338
    %v1340 = vpop.f32.mrb[0].mxu0
    %v1341 = vadd.f32 %v1228, %v1340
    %v1342 = vpop.f32.mrb[0].mxu0
    %v1343 = vadd.f32 %v1230, %v1342
    %v1344 = vpop.f32.mrb[0].mxu0
    %v1345 = vadd.f32 %v1232, %v1344
    %1346 = vmatprep.mubr.bf16.mxu0 %v1136
    %1347 = vmatmul.mubr.bf16.gmra.mrb[0].mxu0 %v488
    %v1348 = vpop.f32.mrb[0].mxu0
    %v1349 = vadd.f32 %v1236, %v1348
    %v1350 = vpop.f32.mrb[0].mxu0
    %v1351 = vadd.f32 %v1238, %v1350
    %v1352 = vpop.f32.mrb[0].mxu0
    %v1353 = vadd.f32 %v1240, %v1352
    %v1354 = vpop.f32.mrb[0].mxu0
    %v1355 = vadd.f32 %v1242, %v1354
    %1356 = vmatprep.mubr.bf16.mxu0 %v1139
    %1357 = vmatmul.mubr.bf16.gmra.mrb[0].mxu0 %v492
    %v1358 = vpop.f32.mrb[0].mxu0
    %v1359 = vadd.f32 %v1246, %v1358
    %v1360 = vpop.f32.mrb[0].mxu0
    %v1361 = vadd.f32 %v1248, %v1360
    %v1362 = vpop.f32.mrb[0].mxu0
    %v1363 = vadd.f32 %v1250, %v1362
    %v1364 = vpop.f32.mrb[0].mxu0
    %v1365 = vadd.f32 %v1252, %v1364
    %1366 = vdwg.mxu0
    %1367 = vmatprep.subr.bf16.mxu0 %v919
    %1368 = vmatpush1.bf16.msra.mxu0 %v918
    %1369 = vmatprep.subr.bf16.mxu0 %v923
    %1370 = vmatpush1.bf16.msra.mxu0 %v922
    %1371 = vmatprep.subr.bf16.mxu0 %v927
    %1372 = vmatpush1.bf16.msra.mxu0 %v926
    %1373 = vmatprep.subr.bf16.mxu0 %v931
    %1374 = vmatpush1.bf16.msra.mxu0 %v930
    %1375 = vmatprep.subr.bf16.mxu0 %v935
    %1376 = vmatpush1.bf16.msra.mxu0 %v934
    %1377 = vmatprep.subr.bf16.mxu0 %v939
    %1378 = vmatpush1.bf16.msra.mxu0 %v938
    %1379 = vmatprep.subr.bf16.mxu0 %v943
    %1380 = vmatpush1.bf16.msra.mxu0 %v942
    %1381 = vmatprep.subr.bf16.mxu0 %v947
    %1382 = vmatpush1.bf16.msra.mxu0 %v946
    %1383 = vmatprep.subr.bf16.mxu0 %v951
    %1384 = vmatpush1.bf16.msra.mxu0 %v950
    %1385 = vmatprep.subr.bf16.mxu0 %v955
    %1386 = vmatpush1.bf16.msra.mxu0 %v954
    %1387 = vmatprep.subr.bf16.mxu0 %v959
    %1388 = vmatpush1.bf16.msra.mxu0 %v958
    %1389 = vmatprep.subr.bf16.mxu0 %v963
    %1390 = vmatpush1.bf16.msra.mxu0 %v962
    %1391 = vmatprep.subr.bf16.mxu0 %v967
    %1392 = vmatpush1.bf16.msra.mxu0 %v966
    %1393 = vmatprep.subr.bf16.mxu0 %v971
    %1394 = vmatpush1.bf16.msra.mxu0 %v970
    %1395 = vmatprep.subr.bf16.mxu0 %v975
    %1396 = vmatpush1.bf16.msra.mxu0 %v974
    %1397 = vmatprep.subr.bf16.mxu0 %v979
    %1398 = vmatpush1.bf16.msra.mxu0 %v978
    %1399 = vmatprep.mubr.bf16.mxu0 %v463
    %1400 = vmatmul.mubr.bf16.gmra.mrb[0].mxu0 %v462
    %v1401 = vpop.f32.mrb[0].mxu0
    %v1402 = vadd.f32 %v607, %v1401
    %v1403 = vpop.f32.mrb[0].mxu0
    %v1404 = vadd.f32 %v611, %v1403
    %v1405 = vpop.f32.mrb[0].mxu0
    %v1406 = vadd.f32 %v607, %v1405
    %v1407 = vpop.f32.mrb[0].mxu0
    %v1408 = vadd.f32 %v611, %v1407
    %1409 = vmatprep.mubr.bf16.mxu0 %v467
    %1410 = vmatmul.mubr.bf16.gmra.mrb[0].mxu0 %v466
    %v1411 = vpop.f32.mrb[0].mxu0
    %v1412 = vadd.f32 %v607, %v1411
    %v1413 = vpop.f32.mrb[0].mxu0
    %v1414 = vadd.f32 %v611, %v1413
    %v1415 = vpop.f32.mrb[0].mxu0
    %v1416 = vadd.f32 %v607, %v1415
    %v1417 = vpop.f32.mrb[0].mxu0
    %v1418 = vadd.f32 %v611, %v1417
    %1419 = vmatprep.mubr.bf16.mxu0 %v471
    %1420 = vmatmul.mubr.bf16.gmra.mrb[0].mxu0 %v470
    %v1421 = vpop.f32.mrb[0].mxu0
    %v1422 = vadd.f32 %v607, %v1421
    %v1423 = vpop.f32.mrb[0].mxu0
    %v1424 = vadd.f32 %v611, %v1423
    %v1425 = vpop.f32.mrb[0].mxu0
    %v1426 = vadd.f32 %v607, %v1425
    %v1427 = vpop.f32.mrb[0].mxu0
    %v1428 = vadd.f32 %v611, %v1427
    %1429 = vmatprep.mubr.bf16.mxu0 %v475
    %1430 = vmatmul.mubr.bf16.gmra.mrb[0].mxu0 %v474
    %v1431 = vpop.f32.mrb[0].mxu0
    %v1432 = vadd.f32 %v607, %v1431
    %v1433 = vpop.f32.mrb[0].mxu0
    %v1434 = vadd.f32 %v611, %v1433
    %v1435 = vpop.f32.mrb[0].mxu0
    %v1436 = vadd.f32 %v607, %v1435
    %v1437 = vpop.f32.mrb[0].mxu0
    %v1438 = vadd.f32 %v611, %v1437
    %1439 = vmatprep.mubr.bf16.mxu0 %v479
    %1440 = vmatmul.mubr.bf16.gmra.mrb[0].mxu0 %v478
    %v1441 = vpop.f32.mrb[0].mxu0
    %v1442 = vadd.f32 %v607, %v1441
    %v1443 = vpop.f32.mrb[0].mxu0
    %v1444 = vadd.f32 %v611, %v1443
    %v1445 = vpop.f32.mrb[0].mxu0
    %v1446 = vadd.f32 %v607, %v1445
    %v1447 = vpop.f32.mrb[0].mxu0
    %v1448 = vadd.f32 %v611, %v1447
    %1449 = vmatprep.mubr.bf16.mxu0 %v483
    %1450 = vmatmul.mubr.bf16.gmra.mrb[0].mxu0 %v482
    %v1451 = vpop.f32.mrb[0].mxu0
    %v1452 = vadd.f32 %v607, %v1451
    %v1453 = vpop.f32.mrb[0].mxu0
    %v1454 = vadd.f32 %v611, %v1453
    %v1455 = vpop.f32.mrb[0].mxu0
    %v1456 = vadd.f32 %v607, %v1455
    %v1457 = vpop.f32.mrb[0].mxu0
    %v1458 = vadd.f32 %v611, %v1457
    %1459 = vmatprep.mubr.bf16.mxu0 %v487
    %1460 = vmatmul.mubr.bf16.gmra.mrb[0].mxu0 %v486
    %v1461 = vpop.f32.mrb[0].mxu0
    %v1462 = vadd.f32 %v607, %v1461
    %v1463 = vpop.f32.mrb[0].mxu0
    %v1464 = vadd.f32 %v611, %v1463
    %v1465 = vpop.f32.mrb[0].mxu0
    %v1466 = vadd.f32 %v607, %v1465
    %v1467 = vpop.f32.mrb[0].mxu0
    %v1468 = vadd.f32 %v611, %v1467
    %1469 = vmatprep.mubr.bf16.mxu0 %v491
    %1470 = vmatmul.mubr.bf16.gmra.mrb[0].mxu0 %v490
    %v1471 = vpop.f32.mrb[0].mxu0
    %v1472 = vadd.f32 %v607, %v1471
    %v1473 = vpop.f32.mrb[0].mxu0
    %v1474 = vadd.f32 %v611, %v1473
    %v1475 = vpop.f32.mrb[0].mxu0
    %v1476 = vadd.f32 %v607, %v1475
    %v1477 = vpop.f32.mrb[0].mxu0
    %v1478 = vadd.f32 %v611, %v1477
    %1479 = vdwg.mxu0
    %1480 = vmatprep.subr.bf16.mxu0 %v983
    %1481 = vmatpush1.bf16.msra.mxu0 %v982
    %1482 = vmatprep.subr.bf16.mxu0 %v987
    %1483 = vmatpush1.bf16.msra.mxu0 %v986
    %1484 = vmatprep.subr.bf16.mxu0 %v991
    %1485 = vmatpush1.bf16.msra.mxu0 %v990
    %1486 = vmatprep.subr.bf16.mxu0 %v995
    %1487 = vmatpush1.bf16.msra.mxu0 %v994
    %1488 = vmatprep.subr.bf16.mxu0 %v999
    %1489 = vmatpush1.bf16.msra.mxu0 %v998
    %1490 = vmatprep.subr.bf16.mxu0 %v1003
    %1491 = vmatpush1.bf16.msra.mxu0 %v1002
    %1492 = vmatprep.subr.bf16.mxu0 %v1007
    %1493 = vmatpush1.bf16.msra.mxu0 %v1006
    %1494 = vmatprep.subr.bf16.mxu0 %v1011
    %1495 = vmatpush1.bf16.msra.mxu0 %v1010
    %1496 = vmatprep.subr.bf16.mxu0 %v1015
    %1497 = vmatpush1.bf16.msra.mxu0 %v1014
    %1498 = vmatprep.subr.bf16.mxu0 0
    %1499 = vmatpush1.bf16.msra.mxu0 0
    %1500 = vmatprep.subr.bf16.mxu0 0
    %1501 = vmatpush1.bf16.msra.mxu0 0
    %1502 = vmatprep.subr.bf16.mxu0 0
    %1503 = vmatpush1.bf16.msra.mxu0 0
    %1504 = vmatprep.subr.bf16.mxu0 0
    %1505 = vmatpush1.bf16.msra.mxu0 0
    %1506 = vmatprep.subr.bf16.mxu0 0
    %1507 = vmatpush1.bf16.msra.mxu0 0
    %1508 = vmatprep.subr.bf16.mxu0 0
    %1509 = vmatpush1.bf16.msra.mxu0 0
    %1510 = vmatprep.subr.bf16.mxu0 0
    %1511 = vmatpush1.bf16.msra.mxu0 0
    %1512 = vmatprep.mubr.bf16.mxu0 %v1118
    %1513 = vmatmul.mubr.bf16.gmra.mrb[0].mxu0 %v464
    %v1514 = vpop.f32.mrb[0].mxu0
    %v1515 = vadd.f32 %v1402, %v1514
    %v1516 = vpop.f32.mrb[0].mxu0
    %v1517 = vadd.f32 %v1404, %v1516
    %v1518 = vpop.f32.mrb[0].mxu0
    %v1519 = vadd.f32 %v1406, %v1518
    %v1520 = vpop.f32.mrb[0].mxu0
    %v1521 = vadd.f32 %v1408, %v1520
    %1522 = vmatprep.mubr.bf16.mxu0 %v1121
    %1523 = vmatmul.mubr.bf16.gmra.mrb[0].mxu0 %v468
    %v1524 = vpop.f32.mrb[0].mxu0
    %v1525 = vadd.f32 %v1412, %v1524
    %v1526 = vpop.f32.mrb[0].mxu0
    %v1527 = vadd.f32 %v1414, %v1526
    %v1528 = vpop.f32.mrb[0].mxu0
    %v1529 = vadd.f32 %v1416, %v1528
    %v1530 = vpop.f32.mrb[0].mxu0
    %v1531 = vadd.f32 %v1418, %v1530
    %1532 = vmatprep.mubr.bf16.mxu0 %v1124
    %1533 = vmatmul.mubr.bf16.gmra.mrb[0].mxu0 %v472
    %v1534 = vpop.f32.mrb[0].mxu0
    %v1535 = vadd.f32 %v1422, %v1534
    %v1536 = vpop.f32.mrb[0].mxu0
    %v1537 = vadd.f32 %v1424, %v1536
    %v1538 = vpop.f32.mrb[0].mxu0
    %v1539 = vadd.f32 %v1426, %v1538
    %v1540 = vpop.f32.mrb[0].mxu0
    %v1541 = vadd.f32 %v1428, %v1540
    %1542 = vmatprep.mubr.bf16.mxu0 %v1127
    %1543 = vmatmul.mubr.bf16.gmra.mrb[0].mxu0 %v476
    %v1544 = vpop.f32.mrb[0].mxu0
    %v1545 = vadd.f32 %v1432, %v1544
    %v1546 = vpop.f32.mrb[0].mxu0
    %v1547 = vadd.f32 %v1434, %v1546
    %v1548 = vpop.f32.mrb[0].mxu0
    %v1549 = vadd.f32 %v1436, %v1548
    %v1550 = vpop.f32.mrb[0].mxu0
    %v1551 = vadd.f32 %v1438, %v1550
    %1552 = vmatprep.mubr.bf16.mxu0 %v1130
    %1553 = vmatmul.mubr.bf16.gmra.mrb[0].mxu0 %v480
    %v1554 = vpop.f32.mrb[0].mxu0
    %v1555 = vadd.f32 %v1442, %v1554
    %v1556 = vpop.f32.mrb[0].mxu0
    %v1557 = vadd.f32 %v1444, %v1556
    %v1558 = vpop.f32.mrb[0].mxu0
    %v1559 = vadd.f32 %v1446, %v1558
    %v1560 = vpop.f32.mrb[0].mxu0
    %v1561 = vadd.f32 %v1448, %v1560
    %1562 = vmatprep.mubr.bf16.mxu0 %v1133
    %1563 = vmatmul.mubr.bf16.gmra.mrb[0].mxu0 %v484
    %v1564 = vpop.f32.mrb[0].mxu0
    %v1565 = vadd.f32 %v1452, %v1564
    %v1566 = vpop.f32.mrb[0].mxu0
    %v1567 = vadd.f32 %v1454, %v1566
    %v1568 = vpop.f32.mrb[0].mxu0
    %v1569 = vadd.f32 %v1456, %v1568
    %v1570 = vpop.f32.mrb[0].mxu0
    %v1571 = vadd.f32 %v1458, %v1570
    %1572 = vmatprep.mubr.bf16.mxu0 %v1136
    %1573 = vmatmul.mubr.bf16.gmra.mrb[0].mxu0 %v488
    %v1574 = vpop.f32.mrb[0].mxu0
    %v1575 = vadd.f32 %v1462, %v1574
    %v1576 = vpop.f32.mrb[0].mxu0
    %v1577 = vadd.f32 %v1464, %v1576
    %v1578 = vpop.f32.mrb[0].mxu0
    %v1579 = vadd.f32 %v1466, %v1578
    %v1580 = vpop.f32.mrb[0].mxu0
    %v1581 = vadd.f32 %v1468, %v1580
    %1582 = vmatprep.mubr.bf16.mxu0 %v1139
    %1583 = vmatmul.mubr.bf16.gmra.mrb[0].mxu0 %v492
    %v1584 = vpop.f32.mrb[0].mxu0
    %v1585 = vadd.f32 %v1472, %v1584
    %v1586 = vpop.f32.mrb[0].mxu0
    %v1587 = vadd.f32 %v1474, %v1586
    %v1588 = vpop.f32.mrb[0].mxu0
    %v1589 = vadd.f32 %v1476, %v1588
    %v1590 = vpop.f32.mrb[0].mxu0
    %v1591 = vadd.f32 %v1478, %v1590
    %1592 = vdwg.mxu0
    %v1593 = vtanh.pop %v1289
    %v1594 = vtanh.pop %v1291
    %v1595 = vtanh.pop %v1515
    %v1596 = vtanh.pop %v1517
    %v1597 = vtanh.pop %v1293
    %v1598 = vtanh.pop %v1295
    %v1599 = vtanh.pop %v1519
    %v1600 = vtanh.pop %v1521
    %v1601 = vtanh.pop %v1299
    %v1602 = vtanh.pop %v1301
    %v1603 = vtanh.pop %v1525
    %v1604 = vtanh.pop %v1527
    %v1605 = vtanh.pop %v1303
    %v1606 = vtanh.pop %v1305
    %v1607 = vtanh.pop %v1529
    %v1608 = vtanh.pop %v1531
    %v1609 = vtanh.pop %v1309
    %v1610 = vtanh.pop %v1311
    %v1611 = vtanh.pop %v1535
    %v1612 = vtanh.pop %v1537
    %v1613 = vtanh.pop %v1313
    %v1614 = vtanh.pop %v1315
    %v1615 = vtanh.pop %v1539
    %v1616 = vtanh.pop %v1541
    %v1617 = vtanh.pop %v1319
    %v1618 = vtanh.pop %v1321
    %v1619 = vtanh.pop %v1545
    %v1620 = vtanh.pop %v1547
    %v1621 = vtanh.pop %v1323
    %v1622 = vtanh.pop %v1325
    %v1623 = vtanh.pop %v1549
    %v1624 = vtanh.pop %v1551
    %v1625 = vtanh.pop %v1329
    %v1626 = vtanh.pop %v1331
    %v1627 = vtanh.pop %v1555
    %v1628 = vtanh.pop %v1557
    %v1629 = vtanh.pop %v1333
    %v1630 = vtanh.pop %v1335
    %v1631 = vtanh.pop %v1559
    %v1632 = vtanh.pop %v1561
    %v1633 = vtanh.pop %v1339
    %v1634 = vtanh.pop %v1341
    %v1635 = vtanh.pop %v1565
    %v1636 = vtanh.pop %v1567
    %v1637 = vtanh.pop %v1343
    %v1638 = vtanh.pop %v1345
    %v1639 = vtanh.pop %v1569
    %v1640 = vtanh.pop %v1571
    %v1641 = vtanh.pop %v1349
    %v1642 = vtanh.pop %v1351
    %v1643 = vtanh.pop %v1575
    %v1644 = vtanh.pop %v1577
    %v1645 = vtanh.pop %v1353
    %v1646 = vtanh.pop %v1355
    %v1647 = vtanh.pop %v1579
    %v1648 = vtanh.pop %v1581
    %v1649 = vtanh.pop %v1359
    %v1650 = vtanh.pop %v1361
    %v1651 = vtanh.pop %v1585
    %v1652 = vtanh.pop %v1587
    %v1653 = vtanh.pop %v1363
    %v1654 = vtanh.pop %v1365
    %v1655 = vtanh.pop %v1589
    %v1656 = vtanh.pop %v1591
    %v1657 = vpack.c.bf16 %v1597, %v1593
    %v1658 = vpack.c.bf16 %v1598, %v1594
    %v1659 = vpack.c.bf16 %v1599, %v1595
    %v1660 = vpack.c.bf16 %v1600, %v1596
    %v1661 = vpack.c.bf16 %v1605, %v1601
    %v1662 = vpack.c.bf16 %v1606, %v1602
    %v1663 = vpack.c.bf16 %v1607, %v1603
    %v1664 = vpack.c.bf16 %v1608, %v1604
    %v1665 = vpack.c.bf16 %v1613, %v1609
    %v1666 = vpack.c.bf16 %v1614, %v1610
    %v1667 = vpack.c.bf16 %v1615, %v1611
    %v1668 = vpack.c.bf16 %v1616, %v1612
    %v1669 = vpack.c.bf16 %v1621, %v1617
    %v1670 = vpack.c.bf16 %v1622, %v1618
    %v1671 = vpack.c.bf16 %v1623, %v1619
    %v1672 = vpack.c.bf16 %v1624, %v1620
    %v1673 = vpack.c.bf16 %v1629, %v1625
    %v1674 = vpack.c.bf16 %v1630, %v1626
    %v1675 = vpack.c.bf16 %v1631, %v1627
    %v1676 = vpack.c.bf16 %v1632, %v1628
    %v1677 = vpack.c.bf16 %v1637, %v1633
    %v1678 = vpack.c.bf16 %v1638, %v1634
    %v1679 = vpack.c.bf16 %v1639, %v1635
    %v1680 = vpack.c.bf16 %v1640, %v1636
    %v1681 = vpack.c.bf16 %v1645, %v1641
    %v1682 = vpack.c.bf16 %v1646, %v1642
    %v1683 = vpack.c.bf16 %v1647, %v1643
    %v1684 = vpack.c.bf16 %v1648, %v1644
    %v1685 = vpack.c.bf16 %v1653, %v1649
    %v1686 = vpack.c.bf16 %v1654, %v1650
    %v1687 = vpack.c.bf16 %v1655, %v1651
    %v1688 = vpack.c.bf16 %v1656, %v1652
    %v1689 = vld [vmem:[%s5] sm:$0xf]
    %v1690 = vld [vmem:[%s5 + $0x4] sm:$0xf]
    %v1691 = vld [vmem:[%s5 + $0x8] sm:$0xf]
    %v1692 = vld [vmem:[%s5 + $0xc] sm:$0xf]
    %v1693 = vld [vmem:[%s5 + $0x10] sm:$0xf]
    %v1694 = vld [vmem:[%s5 + $0x14] sm:$0xf]
    %v1695 = vld [vmem:[%s5 + $0x18] sm:$0xf]
    %v1696 = vld [vmem:[%s5 + $0x1c] sm:$0xf]
    %v1697 = vld [vmem:[%s5 + $0x20] sm:$0xf]
    %v1698 = vld [vmem:[%s5 + $0x24] sm:$0xf]
    %v1699 = vld [vmem:[%s5 + $0x28] sm:$0xf]
    %v1700 = vld [vmem:[%s5 + $0x2c] sm:$0xf]
    %v1701 = vld [vmem:[%s5 + $0x30] sm:$0xf]
    %v1702 = vld [vmem:[%s5 + $0x34] sm:$0xf]
    %v1703 = vld [vmem:[%s5 + $0x38] sm:$0xf]
    %v1704 = vld [vmem:[%s5 + $0x3c] sm:$0xf]
    %v1705 = vld [vmem:[%s5 + $0x40] sm:$0xf]
    %v1706 = vld [vmem:[%s5 + $0x44] sm:$0xf]
    %v1707 = vld [vmem:[%s5 + $0x48] sm:$0xf]
    %v1708 = vld [vmem:[%s5 + $0x4c] sm:$0xf]
    %v1709 = vld [vmem:[%s5 + $0x50] sm:$0xf]
    %v1710 = vld [vmem:[%s5 + $0x54] sm:$0xf]
    %v1711 = vld [vmem:[%s5 + $0x58] sm:$0xf]
    %v1712 = vld [vmem:[%s5 + $0x5c] sm:$0xf]
    %v1713 = vld [vmem:[%s5 + $0x60] sm:$0xf]
    %v1714 = vld [vmem:[%s5 + $0x64] sm:$0xf]
    %v1715 = vld [vmem:[%s5 + $0x68] sm:$0xf]
    %v1716 = vld [vmem:[%s5 + $0x6c] sm:$0xf]
    %v1717 = vld [vmem:[%s5 + $0x70] sm:$0xf]
    %v1718 = vld [vmem:[%s5 + $0x74] sm:$0xf]
    %v1719 = vld [vmem:[%s5 + $0x78] sm:$0xf]
    %v1720 = vld [vmem:[%s5 + $0x7c] sm:$0xf]
    %v1721 = vld [vmem:[%s5 + $0x80] sm:$0xf]
    %v1722 = vld [vmem:[%s5 + $0x84] sm:$0xf]
    %v1723 = vld [vmem:[%s5 + $0x88] sm:$0xf]
    %v1724 = vld [vmem:[%s5 + $0x8c] sm:$0xf]
    %v1725 = vld [vmem:[%s5 + $0x90] sm:$0xf]
    %v1726 = vld [vmem:[%s5 + $0x94] sm:$0xf]
    %v1727 = vld [vmem:[%s5 + $0x98] sm:$0xf]
    %v1728 = vld [vmem:[%s5 + $0x9c] sm:$0xf]
    %v1729 = vld [vmem:[%s5 + $0xa0] sm:$0xf]
    %v1730 = vld [vmem:[%s5 + $0xa4] sm:$0xf]
    %v1731 = vld [vmem:[%s5 + $0xa8] sm:$0xf]
    %v1732 = vld [vmem:[%s5 + $0xac] sm:$0xf]
    %v1733 = vld [vmem:[%s5 + $0xb0] sm:$0xf]
    %v1734 = vld [vmem:[%s5 + $0xb4] sm:$0xf]
    %v1735 = vld [vmem:[%s5 + $0xb8] sm:$0xf]
    %v1736 = vld [vmem:[%s5 + $0xbc] sm:$0xf]
    %v1737 = vld [vmem:[%s5 + $0xc0] sm:$0xf]
    %v1738 = vld [vmem:[%s5 + $0xc4] sm:$0xf]
    %v1739 = vld [vmem:[%s6] sm:$0x1]
    %v1741 = vlaneseq
    %v1742 = vshrl.u32 %v1741, 7
    %v1743 = vsub.s32 0, %v1742
    %v1744 = vrot.slane %v1739, %v1743
    %v1796 = vunpack.c.l.b16 %v1689
    %v1797 = vunpack.c.l.b16 %v1690
    %v1798 = vunpack.c.l.b16 %v1691
    %v1799 = vunpack.c.l.b16 %v1692
    %v1800 = vunpack.c.l.b16 %v1693
    %v1801 = vunpack.c.l.b16 %v1694
    %v1802 = vunpack.c.l.b16 %v1695
    %v1803 = vunpack.c.l.b16 %v1696
    %v1804 = vunpack.c.l.b16 %v1697
    %v1805 = vunpack.c.l.b16 %v1698
    %v1806 = vunpack.c.l.b16 %v1699
    %v1807 = vunpack.c.l.b16 %v1700
    %v1808 = vunpack.c.l.b16 %v1701
    %v1809 = vunpack.c.l.b16 %v1702
    %v1810 = vunpack.c.l.b16 %v1703
    %v1811 = vunpack.c.l.b16 %v1704
    %v1812 = vunpack.c.l.b16 %v1705
    %v1813 = vunpack.c.l.b16 %v1706
    %v1814 = vunpack.c.l.b16 %v1707
    %v1815 = vunpack.c.l.b16 %v1708
    %v1816 = vunpack.c.l.b16 %v1709
    %v1817 = vunpack.c.l.b16 %v1710
    %v1818 = vunpack.c.l.b16 %v1711
    %v1819 = vunpack.c.l.b16 %v1712
    %v1820 = vunpack.c.l.b16 %v1713
    %v1821 = vunpack.c.l.b16 %v1714
    %v1822 = vunpack.c.l.b16 %v1715
    %v1823 = vunpack.c.l.b16 %v1716
    %v1824 = vunpack.c.l.b16 %v1717
    %v1825 = vunpack.c.l.b16 %v1718
    %v1826 = vunpack.c.l.b16 %v1719
    %v1827 = vunpack.c.l.b16 %v1720
    %v1828 = vunpack.c.l.b16 %v1721
    %v1829 = vunpack.c.l.b16 %v1722
    %v1830 = vunpack.c.l.b16 %v1723
    %v1831 = vunpack.c.l.b16 %v1724
    %v1832 = vunpack.c.l.b16 %v1725
    %v1833 = vunpack.c.l.b16 %v1726
    %v1834 = vunpack.c.l.b16 %v1727
    %v1835 = vunpack.c.l.b16 %v1728
    %v1836 = vunpack.c.l.b16 %v1729
    %v1837 = vunpack.c.l.b16 %v1730
    %v1838 = vunpack.c.l.b16 %v1731
    %v1839 = vunpack.c.l.b16 %v1732
    %v1840 = vunpack.c.l.b16 %v1733
    %v1841 = vunpack.c.l.b16 %v1734
    %v1842 = vunpack.c.l.b16 %v1735
    %v1843 = vunpack.c.l.b16 %v1736
    %v1844 = vunpack.c.l.b16 %v1737
    %v1845 = vunpack.c.l.b16 %v1738
    %v1846 = vpack.c.b16 %v1797, %v1796
    %v1847 = vpack.c.b16 %v1799, %v1798
    %v1848 = vpack.c.b16 %v1801, %v1800
    %v1849 = vpack.c.b16 %v1803, %v1802
    %v1850 = vpack.c.b16 %v1805, %v1804
    %v1851 = vpack.c.b16 %v1807, %v1806
    %v1852 = vpack.c.b16 %v1809, %v1808
    %v1853 = vpack.c.b16 %v1811, %v1810
    %v1854 = vpack.c.b16 %v1813, %v1812
    %v1855 = vpack.c.b16 %v1815, %v1814
    %v1856 = vpack.c.b16 %v1817, %v1816
    %v1857 = vpack.c.b16 %v1819, %v1818
    %v1858 = vpack.c.b16 %v1821, %v1820
    %v1859 = vpack.c.b16 %v1823, %v1822
    %v1860 = vpack.c.b16 %v1825, %v1824
    %v1861 = vpack.c.b16 %v1827, %v1826
    %v1862 = vpack.c.b16 %v1829, %v1828
    %v1863 = vpack.c.b16 %v1831, %v1830
    %v1864 = vpack.c.b16 %v1833, %v1832
    %v1865 = vpack.c.b16 %v1835, %v1834
    %v1866 = vpack.c.b16 %v1837, %v1836
    %v1867 = vpack.c.b16 %v1839, %v1838
    %v1868 = vpack.c.b16 %v1841, %v1840
    %v1869 = vpack.c.b16 %v1843, %v1842
    %v1870 = vpack.c.b16 %v1845, %v1844
    %v1897 = vsel %vm1116, %v1660, 0
    %v1900 = vsel %vm1116, %v1664, 0
    %v1903 = vsel %vm1116, %v1668, 0
    %v1906 = vsel %vm1116, %v1672, 0
    %v1909 = vsel %vm1116, %v1676, 0
    %v1912 = vsel %vm1116, %v1680, 0
    %v1915 = vsel %vm1116, %v1684, 0
    %v1918 = vsel %vm1116, %v1688, 0
    %1920 = vmatprep.subr.bf16.mxu0 0
    %1921 = vmatpush1.bf16.msra.mxu0 %v1846
    %1922 = vmatprep.subr.bf16.mxu0 0
    %1923 = vmatpush1.bf16.msra.mxu0 %v1847
    %1924 = vmatprep.subr.bf16.mxu0 0
    %1925 = vmatpush1.bf16.msra.mxu0 %v1848
    %1926 = vmatprep.subr.bf16.mxu0 0
    %1927 = vmatpush1.bf16.msra.mxu0 %v1849
    %1928 = vmatprep.subr.bf16.mxu0 0
    %1929 = vmatpush1.bf16.msra.mxu0 %v1850
    %1930 = vmatprep.subr.bf16.mxu0 0
    %1931 = vmatpush1.bf16.msra.mxu0 %v1851
    %1932 = vmatprep.subr.bf16.mxu0 0
    %1933 = vmatpush1.bf16.msra.mxu0 %v1852
    %1934 = vmatprep.subr.bf16.mxu0 0
    %1935 = vmatpush1.bf16.msra.mxu0 %v1853
    %1936 = vmatprep.subr.bf16.mxu0 0
    %1937 = vmatpush1.bf16.msra.mxu0 %v1854
    %1938 = vmatprep.subr.bf16.mxu0 0
    %1939 = vmatpush1.bf16.msra.mxu0 %v1855
    %1940 = vmatprep.subr.bf16.mxu0 0
    %1941 = vmatpush1.bf16.msra.mxu0 %v1856
    %1942 = vmatprep.subr.bf16.mxu0 0
    %1943 = vmatpush1.bf16.msra.mxu0 %v1857
    %1944 = vmatprep.subr.bf16.mxu0 0
    %1945 = vmatpush1.bf16.msra.mxu0 %v1858
    %1946 = vmatprep.subr.bf16.mxu0 0
    %1947 = vmatpush1.bf16.msra.mxu0 %v1859
    %1948 = vmatprep.subr.bf16.mxu0 0
    %1949 = vmatpush1.bf16.msra.mxu0 %v1860
    %1950 = vmatprep.subr.bf16.mxu0 0
    %1951 = vmatpush1.bf16.msra.mxu0 %v1861
    %1952 = vmatprep.mubr.bf16.mxu0 %v1658
    %1953 = vmatmul.mubr.bf16.gmra.mrb[0].mxu0 %v1657
    %v1954 = vpop.f32.mrb[0].mxu0
    %v1955 = vadd.f32 %v1744, %v1954
    %v1956 = vpop.f32.mrb[0].mxu0
    %v1957 = vpop.f32.mrb[0].mxu0
    %v1958 = vadd.f32 %v1744, %v1957
    %v1959 = vpop.f32.mrb[0].mxu0
    %1960 = vmatprep.mubr.bf16.mxu0 %v1662
    %1961 = vmatmul.mubr.bf16.gmra.mrb[0].mxu0 %v1661
    %v1962 = vpop.f32.mrb[0].mxu0
    %v1963 = vadd.f32 %v1744, %v1962
    %v1964 = vpop.f32.mrb[0].mxu0
    %v1965 = vpop.f32.mrb[0].mxu0
    %v1966 = vadd.f32 %v1744, %v1965
    %v1967 = vpop.f32.mrb[0].mxu0
    %1968 = vmatprep.mubr.bf16.mxu0 %v1666
    %1969 = vmatmul.mubr.bf16.gmra.mrb[0].mxu0 %v1665
    %v1970 = vpop.f32.mrb[0].mxu0
    %v1971 = vadd.f32 %v1744, %v1970
    %v1972 = vpop.f32.mrb[0].mxu0
    %v1973 = vpop.f32.mrb[0].mxu0
    %v1974 = vadd.f32 %v1744, %v1973
    %v1975 = vpop.f32.mrb[0].mxu0
    %1976 = vmatprep.mubr.bf16.mxu0 %v1670
    %1977 = vmatmul.mubr.bf16.gmra.mrb[0].mxu0 %v1669
    %v1978 = vpop.f32.mrb[0].mxu0
    %v1979 = vadd.f32 %v1744, %v1978
    %v1980 = vpop.f32.mrb[0].mxu0
    %v1981 = vpop.f32.mrb[0].mxu0
    %v1982 = vadd.f32 %v1744, %v1981
    %v1983 = vpop.f32.mrb[0].mxu0
    %1984 = vmatprep.mubr.bf16.mxu0 %v1674
    %1985 = vmatmul.mubr.bf16.gmra.mrb[0].mxu0 %v1673
    %v1986 = vpop.f32.mrb[0].mxu0
    %v1987 = vadd.f32 %v1744, %v1986
    %v1988 = vpop.f32.mrb[0].mxu0
    %v1989 = vpop.f32.mrb[0].mxu0
    %v1990 = vadd.f32 %v1744, %v1989
    %v1991 = vpop.f32.mrb[0].mxu0
    %1992 = vmatprep.mubr.bf16.mxu0 %v1678
    %1993 = vmatmul.mubr.bf16.gmra.mrb[0].mxu0 %v1677
    %v1994 = vpop.f32.mrb[0].mxu0
    %v1995 = vadd.f32 %v1744, %v1994
    %v1996 = vpop.f32.mrb[0].mxu0
    %v1997 = vpop.f32.mrb[0].mxu0
    %v1998 = vadd.f32 %v1744, %v1997
    %v1999 = vpop.f32.mrb[0].mxu0
    %2000 = vmatprep.mubr.bf16.mxu0 %v1682
    %2001 = vmatmul.mubr.bf16.gmra.mrb[0].mxu0 %v1681
    %v2002 = vpop.f32.mrb[0].mxu0
    %v2003 = vadd.f32 %v1744, %v2002
    %v2004 = vpop.f32.mrb[0].mxu0
    %v2005 = vpop.f32.mrb[0].mxu0
    %v2006 = vadd.f32 %v1744, %v2005
    %v2007 = vpop.f32.mrb[0].mxu0
    %2008 = vmatprep.mubr.bf16.mxu0 %v1686
    %2009 = vmatmul.mubr.bf16.gmra.mrb[0].mxu0 %v1685
    %v2010 = vpop.f32.mrb[0].mxu0
    %v2011 = vadd.f32 %v1744, %v2010
    %v2012 = vpop.f32.mrb[0].mxu0
    %v2013 = vpop.f32.mrb[0].mxu0
    %v2014 = vadd.f32 %v1744, %v2013
    %v2015 = vpop.f32.mrb[0].mxu0
    %2016 = vdwg.mxu0
    %2017 = vmatprep.subr.bf16.mxu0 0
    %2018 = vmatpush1.bf16.msra.mxu0 %v1862
    %2019 = vmatprep.subr.bf16.mxu0 0
    %2020 = vmatpush1.bf16.msra.mxu0 %v1863
    %2021 = vmatprep.subr.bf16.mxu0 0
    %2022 = vmatpush1.bf16.msra.mxu0 %v1864
    %2023 = vmatprep.subr.bf16.mxu0 0
    %2024 = vmatpush1.bf16.msra.mxu0 %v1865
    %2025 = vmatprep.subr.bf16.mxu0 0
    %2026 = vmatpush1.bf16.msra.mxu0 %v1866
    %2027 = vmatprep.subr.bf16.mxu0 0
    %2028 = vmatpush1.bf16.msra.mxu0 %v1867
    %2029 = vmatprep.subr.bf16.mxu0 0
    %2030 = vmatpush1.bf16.msra.mxu0 %v1868
    %2031 = vmatprep.subr.bf16.mxu0 0
    %2032 = vmatpush1.bf16.msra.mxu0 %v1869
    %2033 = vmatprep.subr.bf16.mxu0 0
    %2034 = vmatpush1.bf16.msra.mxu0 %v1870
    %2035 = vmatprep.subr.bf16.mxu0 0
    %2036 = vmatpush1.bf16.msra.mxu0 0
    %2037 = vmatprep.subr.bf16.mxu0 0
    %2038 = vmatpush1.bf16.msra.mxu0 0
    %2039 = vmatprep.subr.bf16.mxu0 0
    %2040 = vmatpush1.bf16.msra.mxu0 0
    %2041 = vmatprep.subr.bf16.mxu0 0
    %2042 = vmatpush1.bf16.msra.mxu0 0
    %2043 = vmatprep.subr.bf16.mxu0 0
    %2044 = vmatpush1.bf16.msra.mxu0 0
    %2045 = vmatprep.subr.bf16.mxu0 0
    %2046 = vmatpush1.bf16.msra.mxu0 0
    %2047 = vmatprep.subr.bf16.mxu0 0
    %2048 = vmatpush1.bf16.msra.mxu0 0
    %2049 = vmatprep.mubr.bf16.mxu0 %v1897
    %2050 = vmatmul.mubr.bf16.gmra.mrb[0].mxu0 %v1659
    %v2051 = vpop.f32.mrb[0].mxu0
    %v2052 = vadd.f32 %v1955, %v2051
    %v2053 = vpop.f32.mrb[0].mxu0
    %v2054 = vpop.f32.mrb[0].mxu0
    %v2055 = vadd.f32 %v1958, %v2054
    %v2056 = vpop.f32.mrb[0].mxu0
    %2057 = vmatprep.mubr.bf16.mxu0 %v1900
    %2058 = vmatmul.mubr.bf16.gmra.mrb[0].mxu0 %v1663
    %v2059 = vpop.f32.mrb[0].mxu0
    %v2060 = vadd.f32 %v1963, %v2059
    %v2061 = vpop.f32.mrb[0].mxu0
    %v2062 = vpop.f32.mrb[0].mxu0
    %v2063 = vadd.f32 %v1966, %v2062
    %v2064 = vpop.f32.mrb[0].mxu0
    %2065 = vmatprep.mubr.bf16.mxu0 %v1903
    %2066 = vmatmul.mubr.bf16.gmra.mrb[0].mxu0 %v1667
    %v2067 = vpop.f32.mrb[0].mxu0
    %v2068 = vadd.f32 %v1971, %v2067
    %v2069 = vpop.f32.mrb[0].mxu0
    %v2070 = vpop.f32.mrb[0].mxu0
    %v2071 = vadd.f32 %v1974, %v2070
    %v2072 = vpop.f32.mrb[0].mxu0
    %2073 = vmatprep.mubr.bf16.mxu0 %v1906
    %2074 = vmatmul.mubr.bf16.gmra.mrb[0].mxu0 %v1671
    %v2075 = vpop.f32.mrb[0].mxu0
    %v2076 = vadd.f32 %v1979, %v2075
    %v2077 = vpop.f32.mrb[0].mxu0
    %v2078 = vpop.f32.mrb[0].mxu0
    %v2079 = vadd.f32 %v1982, %v2078
    %v2080 = vpop.f32.mrb[0].mxu0
    %2081 = vmatprep.mubr.bf16.mxu0 %v1909
    %2082 = vmatmul.mubr.bf16.gmra.mrb[0].mxu0 %v1675
    %v2083 = vpop.f32.mrb[0].mxu0
    %v2084 = vadd.f32 %v1987, %v2083
    %v2085 = vpop.f32.mrb[0].mxu0
    %v2086 = vpop.f32.mrb[0].mxu0
    %v2087 = vadd.f32 %v1990, %v2086
    %v2088 = vpop.f32.mrb[0].mxu0
    %2089 = vmatprep.mubr.bf16.mxu0 %v1912
    %2090 = vmatmul.mubr.bf16.gmra.mrb[0].mxu0 %v1679
    %v2091 = vpop.f32.mrb[0].mxu0
    %v2092 = vadd.f32 %v1995, %v2091
    %v2093 = vpop.f32.mrb[0].mxu0
    %v2094 = vpop.f32.mrb[0].mxu0
    %v2095 = vadd.f32 %v1998, %v2094
    %v2096 = vpop.f32.mrb[0].mxu0
    %2097 = vmatprep.mubr.bf16.mxu0 %v1915
    %2098 = vmatmul.mubr.bf16.gmra.mrb[0].mxu0 %v1683
    %v2099 = vpop.f32.mrb[0].mxu0
    %v2100 = vadd.f32 %v2003, %v2099
    %v2101 = vpop.f32.mrb[0].mxu0
    %v2102 = vpop.f32.mrb[0].mxu0
    %v2103 = vadd.f32 %v2006, %v2102
    %v2104 = vpop.f32.mrb[0].mxu0
    %2105 = vmatprep.mubr.bf16.mxu0 %v1918
    %2106 = vmatmul.mubr.bf16.gmra.mrb[0].mxu0 %v1687
    %v2107 = vpop.f32.mrb[0].mxu0
    %v2108 = vadd.f32 %v2011, %v2107
    %v2109 = vpop.f32.mrb[0].mxu0
    %v2110 = vpop.f32.mrb[0].mxu0
    %v2111 = vadd.f32 %v2014, %v2110
    %v2112 = vpop.f32.mrb[0].mxu0
    %2113 = vdwg.mxu0
    %vm2114 = vcmask 31744
    %2115 = vst.msk [vmem:[%s7] sm:$0xff] %vm2114, %v2052
    %2116 = vst.msk [vmem:[%s7 + $0x8] sm:$0xff] %vm2114, %v2055
    %2117 = vst.msk [vmem:[%s7 + $0x10] sm:$0xff] %vm2114, %v2060
    %2118 = vst.msk [vmem:[%s7 + $0x18] sm:$0xff] %vm2114, %v2063
    %2119 = vst.msk [vmem:[%s7 + $0x20] sm:$0xff] %vm2114, %v2068
    %2120 = vst.msk [vmem:[%s7 + $0x28] sm:$0xff] %vm2114, %v2071
    %2121 = vst.msk [vmem:[%s7 + $0x30] sm:$0xff] %vm2114, %v2076
    %2122 = vst.msk [vmem:[%s7 + $0x38] sm:$0xff] %vm2114, %v2079
    %2123 = vst.msk [vmem:[%s7 + $0x40] sm:$0xff] %vm2114, %v2084
    %2124 = vst.msk [vmem:[%s7 + $0x48] sm:$0xff] %vm2114, %v2087
    %2125 = vst.msk [vmem:[%s7 + $0x50] sm:$0xff] %vm2114, %v2092
    %2126 = vst.msk [vmem:[%s7 + $0x58] sm:$0xff] %vm2114, %v2095
    %2127 = vst.msk [vmem:[%s7 + $0x60] sm:$0xff] %vm2114, %v2100
    %2128 = vst.msk [vmem:[%s7 + $0x68] sm:$0xff] %vm2114, %v2103
    %2129 = vst.msk [vmem:[%s7 + $0x70] sm:$0xff] %vm2114, %v2108
    %2130 = vst.msk [vmem:[%s7 + $0x78] sm:$0xff] %vm2114, %v2111
    // Predicated region
    $region34: #{tpu_custom_call.1} parent=1 // pred_check
      _
    $region35: #{tpu_custom_call.1} parent=1 // pred_check_branch
      %2132 = sbr.rel (0) target = $region37
    $region36: #{tpu_custom_call.1} parent=1 // pred_region
      _
    $region37: #{tpu_custom_call.1} parent=1 // pred_fallthru
      _
    // Predicated region
    $region38: #{tpu_custom_call.1} parent=1 // pred_check
      _
    $region39: #{tpu_custom_call.1} parent=1 // pred_check_branch
      %2134 = sbr.rel (0) target = $region41
    $region40: #{tpu_custom_call.1} parent=1 // pred_region
      _
    $region41: #{tpu_custom_call.1} parent=1 // pred_fallthru
      _
    %2135 = vsyncpa [#allocation3], 1

</llo_original>
